<compile_context>
chip_gen: v5e
topology: v5e:2x2
jax: 0.10.0
libtpu: 0.0.40
codegen_flags: <defaults>
</compile_context>

<pallas_src>
import jax
import jax.numpy as jnp
from jax import lax
from jax.experimental import pallas as pl
from jax.experimental.pallas import tpu as pltpu


def _neural_ode_kernel(
    dt_ref, hdt_ref, dt6_ref,       # SMEM (T-1,) each: dt, dt/2, dt/6
    x0_ref,                         # VMEM (B, input_dim)
    we1_ref, be1_ref,               # encoder: (input_dim, H), (1, H)
    we2_ref, be2_ref,               # encoder: (H, latent), (1, latent)
    wo1_ref, bo1_ref,               # odefunc layer 1: (latent, H), (1, H)
    wo21_ref, bo21_ref,             # fused:   wo2 @ wo1 (H, H), bo2 @ wo1 (1, H)
    wo2_ref, bo2_ref,               # odefunc layer 2: (H, latent), (1, latent)
    wd1_ref, bd1_ref,               # decoder: (latent, H), (1, H)
    wd2_ref, bd2_ref,               # decoder: (H, output_dim), (1, output_dim)
    out_ref,                        # VMEM (T*B, output_dim)
    z_traj,                         # VMEM scratch (T*B, latent)
):
    f32 = jnp.float32
    B = x0_ref.shape[0]
    H = wo21_ref.shape[0]
    L = wo2_ref.shape[1]
    n_steps = z_traj.shape[0] // B - 1   # = T - 1 (static)

    # ---- Encode initial condition (single-use weights read at point of use). ----
    h0 = jnp.maximum(
        jnp.dot(x0_ref[...], we1_ref[...], preferred_element_type=f32) + be1_ref[...],
        0.0)
    z0 = jnp.dot(h0, we2_ref[...], preferred_element_type=f32) + be2_ref[...]
    z_traj[pl.ds(0, B), :] = z0

    # ---- Only the ODE-func operands stay live across the unrolled RK4 loop. ----
    wo21 = wo21_ref[...]                                    # (H, H)
    wo2 = wo2_ref[...]                                      # (H, L)
    bo21b = jnp.broadcast_to(bo21_ref[...], (B, H))         # hoisted broadcasts
    bo2b = jnp.broadcast_to(bo2_ref[...], (B, L))

    # Carried pre-activation a1 = z @ wo1 + bo1 (wo1/bo1 never needed again).
    a1_0 = jnp.dot(z0, wo1_ref[...], preferred_element_type=f32) + bo1_ref[...]

    def rk4_step(i, carry):
        z, a1 = carry
        dt = dt_ref[i]           # scalars precomputed on host, read from SMEM
        hdt = hdt_ref[i]
        dt6 = dt6_ref[i]
        hdtb = hdt * bo21b
        dtb = dt * bo21b

        # Serial critical chain: 4 matmuls (h @ wo21) + 4 tanh per step.
        h1 = jnp.tanh(a1)
        a2 = a1 + hdt * jnp.dot(h1, wo21, preferred_element_type=jnp.float32) + hdtb
        h2 = jnp.tanh(a2)
        a3 = a1 + hdt * jnp.dot(h2, wo21, preferred_element_type=jnp.float32) + hdtb
        h3 = jnp.tanh(a3)
        a4 = a1 + dt * jnp.dot(h3, wo21, preferred_element_type=jnp.float32) + dtb
        h4 = jnp.tanh(a4)

        hsum = h1 + 2.0 * (h2 + h3) + h4
        a1n = a1 + dt6 * jnp.dot(hsum, wo21, preferred_element_type=jnp.float32) + dtb

        # Latent update: one matmul, off the next step's critical path.
        z_new = z + dt6 * jnp.dot(hsum, wo2, preferred_element_type=jnp.float32) \
                  + dt * bo2b
        z_traj[pl.ds((i + 1) * B, B), :] = z_new
        return z_new, a1n

    # Short static trip count -> fully unroll for cross-stage scheduling.
    lax.fori_loop(0, n_steps, rk4_step, (z0, a1_0), unroll=True)

    # ---- Batched decode epilogue (decoder weights read only here). ----
    zt = z_traj[...]                                                   # (T*B, latent)
    hd = jnp.maximum(
        jnp.dot(zt, wd1_ref[...], preferred_element_type=f32) + bd1_ref[...],
        0.0)
    out_ref[...] = (jnp.dot(hd, wd2_ref[...], preferred_element_type=f32)
                    + bd2_ref[...]).astype(out_ref.dtype)


def neural_ode_pk_forward(x0, t, params, hidden_pad=64):
    """x0: (B, input_dim); t: (T,). Returns decoded trajectory (T, B, output_dim)."""
    B, _ = x0.shape
    T = t.shape[0]
    latent_dim = params["we2"].shape[1]
    output_dim = params["wd2"].shape[1]
    hidden = params["we1"].shape[1]
    hp = max(hidden_pad, hidden)

    # One-time zero-pad of the hidden (=50) dim to a TPU-friendly width.
    def pad_cols(w):
        return jnp.pad(w.astype(jnp.float32), ((0, 0), (0, hp - w.shape[1])))

    def pad_rows(w):
        return jnp.pad(w.astype(jnp.float32), ((0, hp - w.shape[0]), (0, 0)))

    we1, be1 = pad_cols(params["we1"]), pad_cols(params["be1"])
    we2, be2 = pad_rows(params["we2"]), params["be2"].astype(jnp.float32)
    wo1, bo1 = pad_cols(params["wo1"]), pad_cols(params["bo1"])
    wo2, bo2 = pad_rows(params["wo2"]), params["bo2"].astype(jnp.float32)
    wd1, bd1 = pad_cols(params["wd1"]), pad_cols(params["bd1"])
    wd2, bd2 = pad_rows(params["wd2"]), params["bd2"].astype(jnp.float32)

    # Pre-fused ODE-func weights (done once, full f32 precision). Padded rows of
    # wo2 / padded cols of wo1 are exact zeros, so padding semantics are preserved.
    wo21 = jnp.dot(wo2, wo1, precision=lax.Precision.HIGHEST)    # (hp, hp)
    bo21 = jnp.dot(bo2, wo1, precision=lax.Precision.HIGHEST)    # (1, hp)

    # Precompute dt, dt/2, dt/6 on the host; passed through SMEM.
    tf = t.astype(jnp.float32)
    dt = tf[1:] - tf[:-1]
    hdt = 0.5 * dt
    dt6 = dt / 6.0

    kernel_args = (
        dt, hdt, dt6,
        x0.astype(jnp.float32),
        we1, be1, we2, be2,
        wo1, bo1, wo21, bo21, wo2, bo2,
        wd1, bd1, wd2, bd2,
    )

    smem = pl.BlockSpec(memory_space=pltpu.MemorySpace.SMEM)
    vmem = pl.BlockSpec(memory_space=pltpu.MemorySpace.VMEM)
    in_specs = [smem, smem, smem] + [vmem] * (len(kernel_args) - 3)

    out_flat = pl.pallas_call(
        _neural_ode_kernel,
        out_shape=jax.ShapeDtypeStruct((T * B, output_dim), jnp.float32),
        in_specs=in_specs,
        out_specs=vmem,
        scratch_shapes=[pltpu.VMEM((T * B, latent_dim), jnp.float32)],
    )(*kernel_args)

    # Layout plumbing only: present the torchdiffeq-style (T, B, output_dim) view.
    return out_flat.reshape(T, B, output_dim)


def init_params(key, input_dim, latent_dim, output_dim, hidden=50):
    ks = jax.random.split(key, 6)

    def lin(k, fan_in, fan_out):
        kw, kb = jax.random.split(k)
        bound = 1.0 / jnp.sqrt(fan_in)
        w = jax.random.uniform(kw, (fan_in, fan_out), jnp.float32, -bound, bound)
        b = jax.random.uniform(kb, (1, fan_out), jnp.float32, -bound, bound)
        return w, b

    we1, be1 = lin(ks[0], input_dim, hidden)
    we2, be2 = lin(ks[1], hidden, latent_dim)
    wo1, bo1 = lin(ks[2], latent_dim, hidden)
    wo2, bo2 = lin(ks[3], hidden, latent_dim)
    wd1, bd1 = lin(ks[4], latent_dim, hidden)
    wd2, bd2 = lin(ks[5], hidden, output_dim)
    return dict(we1=we1, be1=be1, we2=we2, be2=be2,
                wo1=wo1, bo1=bo1, wo2=wo2, bo2=bo2,
                wd1=wd1, bd1=bd1, wd2=wd2, bd2=bd2)


def _reference_forward(x0, t, p):
    """Pure-JAX reference (same RK4 semantics, unpadded / unfused weights)."""
    def enc(x):
        return jnp.maximum(x @ p["we1"] + p["be1"], 0.0) @ p["we2"] + p["be2"]

    def f(z):
        return jnp.tanh(z @ p["wo1"] + p["bo1"]) @ p["wo2"] + p["bo2"]

    def dec(z):
        return jnp.maximum(z @ p["wd1"] + p["bd1"], 0.0) @ p["wd2"] + p["bd2"]

    z = enc(x0)
    outs = [dec(z)]
    for i in range(t.shape[0] - 1):
        dt = t[i + 1] - t[i]
        k1 = f(z); k2 = f(z + 0.5 * dt * k1)
        k3 = f(z + 0.5 * dt * k2); k4 = f(z + dt * k3)
        z = z + (dt / 6.0) * (k1 + 2.0 * k2 + 2.0 * k3 + k4)
        outs.append(dec(z))
    return jnp.stack(outs, axis=0)


if __name__ == "__main__":
    key = jax.random.PRNGKey(0)
    k_param, k_x = jax.random.split(key)

    B, input_dim, latent_dim, output_dim = 8, 4, 8, 2
    T = 8

    params = init_params(k_param, input_dim, latent_dim, output_dim)
    x0 = jax.random.normal(k_x, (B, input_dim), jnp.float32)
    t = jnp.linspace(0.0, 1.0, T, dtype=jnp.float32)

    out = neural_ode_pk_forward(x0, t, params)
    out = jax.block_until_ready(out)

    ref = _reference_forward(x0, t, params)
    assert out.shape == (T, B, output_dim)
    assert jnp.allclose(out, ref, atol=1e-3, rtol=1e-3), "mismatch vs reference"

    print("KERNEL_OK")
</pallas_src>

<mosaic_0001>
module attributes {stable_mosaic.version = 11 : i64} {
  func.func @_neural_ode_kernel(%arg0: memref<7xf32, #tpu.memory_space<smem>>, %arg1: memref<7xf32, #tpu.memory_space<smem>>, %arg2: memref<7xf32, #tpu.memory_space<smem>>, %arg3: memref<8x4xf32, #tpu.memory_space<vmem>>, %arg4: memref<4x64xf32, #tpu.memory_space<vmem>>, %arg5: memref<1x64xf32, #tpu.memory_space<vmem>>, %arg6: memref<64x8xf32, #tpu.memory_space<vmem>>, %arg7: memref<1x8xf32, #tpu.memory_space<vmem>>, %arg8: memref<8x64xf32, #tpu.memory_space<vmem>>, %arg9: memref<1x64xf32, #tpu.memory_space<vmem>>, %arg10: memref<64x64xf32, #tpu.memory_space<vmem>>, %arg11: memref<1x64xf32, #tpu.memory_space<vmem>>, %arg12: memref<64x8xf32, #tpu.memory_space<vmem>>, %arg13: memref<1x8xf32, #tpu.memory_space<vmem>>, %arg14: memref<8x64xf32, #tpu.memory_space<vmem>>, %arg15: memref<1x64xf32, #tpu.memory_space<vmem>>, %arg16: memref<64x2xf32, #tpu.memory_space<vmem>>, %arg17: memref<1x2xf32, #tpu.memory_space<vmem>>, %arg18: memref<64x2xf32, #tpu.memory_space<vmem>>, %arg19: memref<64x8xf32, #tpu.memory_space<vmem>>) attributes {dimension_semantics = [], scalar_prefetch = 0 : i64, scratch_operands = 1 : i64, tpu.core_type = #tpu.core_type<tc>} {
    %c0 = arith.constant 0 : index
    %c0_0 = arith.constant 0 : index
    %0 = vector.load %arg3[%c0, %c0_0] : memref<8x4xf32, #tpu.memory_space<vmem>>, vector<8x4xf32>
    %c0_1 = arith.constant 0 : index
    %c0_2 = arith.constant 0 : index
    %1 = vector.load %arg4[%c0_1, %c0_2] : memref<4x64xf32, #tpu.memory_space<vmem>>, vector<4x64xf32>
    %cst = arith.constant dense<0.000000e+00> : vector<8x64xf32>
    %2 = tpu.matmul %0, %1, %cst {dimension_numbers = #tpu.dot_dimension_numbers<[1], [0], [0], [1], [0, 0, 1, 1], [], []>} : vector<8x4xf32>, vector<4x64xf32>, vector<8x64xf32> -> vector<8x64xf32>
    %c0_3 = arith.constant 0 : index
    %c0_4 = arith.constant 0 : index
    %3 = vector.load %arg5[%c0_3, %c0_4] : memref<1x64xf32, #tpu.memory_space<vmem>>, vector<1x64xf32>
    %4 = vector.broadcast %3 : vector<1x64xf32> to vector<8x64xf32>
    %5 = arith.addf %2, %4 : vector<8x64xf32>
    %cst_5 = arith.constant 0.000000e+00 : f32
    %6 = vector.broadcast %cst_5 : f32 to vector<8x64xf32>
    %7 = arith.maximumf %5, %6 : vector<8x64xf32>
    %c0_6 = arith.constant 0 : index
    %c0_7 = arith.constant 0 : index
    %8 = vector.load %arg6[%c0_6, %c0_7] : memref<64x8xf32, #tpu.memory_space<vmem>>, vector<64x8xf32>
    %cst_8 = arith.constant dense<0.000000e+00> : vector<8x8xf32>
    %9 = tpu.matmul %7, %8, %cst_8 {dimension_numbers = #tpu.dot_dimension_numbers<[1], [0], [0], [1], [0, 0, 1, 1], [], []>} : vector<8x64xf32>, vector<64x8xf32>, vector<8x8xf32> -> vector<8x8xf32>
    %c0_9 = arith.constant 0 : index
    %c0_10 = arith.constant 0 : index
    %10 = vector.load %arg7[%c0_9, %c0_10] : memref<1x8xf32, #tpu.memory_space<vmem>>, vector<1x8xf32>
    %11 = vector.broadcast %10 : vector<1x8xf32> to vector<8x8xf32>
    %12 = arith.addf %9, %11 : vector<8x8xf32>
    %c0_11 = arith.constant 0 : index
    %c0_12 = arith.constant 0 : index
    %13 = vector.load %arg19[%c0_11, %c0_12] : memref<64x8xf32, #tpu.memory_space<vmem>>, vector<8x8xf32>
    tpu.vector_store %arg19[%c0_11, %c0_12], %12 {strides = array<i32>} : memref<64x8xf32, #tpu.memory_space<vmem>>, vector<8x8xf32>,
    %c0_13 = arith.constant 0 : index
    %c0_14 = arith.constant 0 : index
    %14 = vector.load %arg10[%c0_13, %c0_14] : memref<64x64xf32, #tpu.memory_space<vmem>>, vector<64x64xf32>
    %c0_15 = arith.constant 0 : index
    %c0_16 = arith.constant 0 : index
    %15 = vector.load %arg12[%c0_15, %c0_16] : memref<64x8xf32, #tpu.memory_space<vmem>>, vector<64x8xf32>
    %c0_17 = arith.constant 0 : index
    %c0_18 = arith.constant 0 : index
    %16 = vector.load %arg11[%c0_17, %c0_18] : memref<1x64xf32, #tpu.memory_space<vmem>>, vector<1x64xf32>
    %17 = vector.shape_cast %16 : vector<1x64xf32> to vector<1x64xf32>
    %18 = vector.broadcast %17 : vector<1x64xf32> to vector<8x64xf32>
    %c0_19 = arith.constant 0 : index
    %c0_20 = arith.constant 0 : index
    %19 = vector.load %arg13[%c0_19, %c0_20] : memref<1x8xf32, #tpu.memory_space<vmem>>, vector<1x8xf32>
    %20 = vector.shape_cast %19 : vector<1x8xf32> to vector<1x8xf32>
    %21 = vector.broadcast %20 : vector<1x8xf32> to vector<8x8xf32>
    %c0_21 = arith.constant 0 : index
    %c0_22 = arith.constant 0 : index
    %22 = vector.load %arg8[%c0_21, %c0_22] : memref<8x64xf32, #tpu.memory_space<vmem>>, vector<8x64xf32>
    %cst_23 = arith.constant dense<0.000000e+00> : vector<8x64xf32>
    %23 = tpu.matmul %12, %22, %cst_23 {dimension_numbers = #tpu.dot_dimension_numbers<[1], [0], [0], [1], [0, 0, 1, 1], [], []>} : vector<8x8xf32>, vector<8x64xf32>, vector<8x64xf32> -> vector<8x64xf32>
    %c0_24 = arith.constant 0 : index
    %c0_25 = arith.constant 0 : index
    %24 = vector.load %arg9[%c0_24, %c0_25] : memref<1x64xf32, #tpu.memory_space<vmem>>, vector<1x64xf32>
    %25 = vector.broadcast %24 : vector<1x64xf32> to vector<8x64xf32>
    %26 = arith.addf %23, %25 : vector<8x64xf32>
    %c0_i32 = arith.constant 0 : i32
    %27 = arith.index_cast %c0_i32 : i32 to index
    %28 = memref.load %arg0[%27] : memref<7xf32, #tpu.memory_space<smem>>
    %29 = arith.index_cast %c0_i32 : i32 to index
    %30 = memref.load %arg1[%29] : memref<7xf32, #tpu.memory_space<smem>>
    %31 = arith.index_cast %c0_i32 : i32 to index
    %32 = memref.load %arg2[%31] : memref<7xf32, #tpu.memory_space<smem>>
    %33 = vector.broadcast %30 : f32 to vector<8x64xf32>
    %34 = arith.mulf %33, %18 : vector<8x64xf32>
    %35 = vector.broadcast %28 : f32 to vector<8x64xf32>
    %36 = arith.mulf %35, %18 : vector<8x64xf32>
    %37 = math.tanh %26 : vector<8x64xf32>
    %cst_26 = arith.constant dense<0.000000e+00> : vector<8x64xf32>
    %38 = tpu.matmul %37, %14, %cst_26 {dimension_numbers = #tpu.dot_dimension_numbers<[1], [0], [0], [1], [0, 0, 1, 1], [], []>} : vector<8x64xf32>, vector<64x64xf32>, vector<8x64xf32> -> vector<8x64xf32>
    %39 = vector.broadcast %30 : f32 to vector<8x64xf32>
    %40 = arith.mulf %39, %38 : vector<8x64xf32>
    %41 = arith.addf %26, %40 : vector<8x64xf32>
    %42 = arith.addf %41, %34 : vector<8x64xf32>
    %43 = math.tanh %42 : vector<8x64xf32>
    %cst_27 = arith.constant dense<0.000000e+00> : vector<8x64xf32>
    %44 = tpu.matmul %43, %14, %cst_27 {dimension_numbers = #tpu.dot_dimension_numbers<[1], [0], [0], [1], [0, 0, 1, 1], [], []>} : vector<8x64xf32>, vector<64x64xf32>, vector<8x64xf32> -> vector<8x64xf32>
    %45 = vector.broadcast %30 : f32 to vector<8x64xf32>
    %46 = arith.mulf %45, %44 : vector<8x64xf32>
    %47 = arith.addf %26, %46 : vector<8x64xf32>
    %48 = arith.addf %47, %34 : vector<8x64xf32>
    %49 = math.tanh %48 : vector<8x64xf32>
    %cst_28 = arith.constant dense<0.000000e+00> : vector<8x64xf32>
    %50 = tpu.matmul %49, %14, %cst_28 {dimension_numbers = #tpu.dot_dimension_numbers<[1], [0], [0], [1], [0, 0, 1, 1], [], []>} : vector<8x64xf32>, vector<64x64xf32>, vector<8x64xf32> -> vector<8x64xf32>
    %51 = vector.broadcast %28 : f32 to vector<8x64xf32>
    %52 = arith.mulf %51, %50 : vector<8x64xf32>
    %53 = arith.addf %26, %52 : vector<8x64xf32>
    %54 = arith.addf %53, %36 : vector<8x64xf32>
    %55 = math.tanh %54 : vector<8x64xf32>
    %56 = arith.addf %43, %49 : vector<8x64xf32>
    %cst_29 = arith.constant 2.000000e+00 : f32
    %57 = vector.broadcast %cst_29 : f32 to vector<8x64xf32>
    %58 = arith.mulf %57, %56 : vector<8x64xf32>
    %59 = arith.addf %37, %58 : vector<8x64xf32>
    %60 = arith.addf %59, %55 : vector<8x64xf32>
    %cst_30 = arith.constant dense<0.000000e+00> : vector<8x64xf32>
    %61 = tpu.matmul %60, %14, %cst_30 {dimension_numbers = #tpu.dot_dimension_numbers<[1], [0], [0], [1], [0, 0, 1, 1], [], []>} : vector<8x64xf32>, vector<64x64xf32>, vector<8x64xf32> -> vector<8x64xf32>
    %62 = vector.broadcast %32 : f32 to vector<8x64xf32>
    %63 = arith.mulf %62, %61 : vector<8x64xf32>
    %64 = arith.addf %26, %63 : vector<8x64xf32>
    %65 = arith.addf %64, %36 : vector<8x64xf32>
    %cst_31 = arith.constant dense<0.000000e+00> : vector<8x8xf32>
    %66 = tpu.matmul %60, %15, %cst_31 {dimension_numbers = #tpu.dot_dimension_numbers<[1], [0], [0], [1], [0, 0, 1, 1], [], []>} : vector<8x64xf32>, vector<64x8xf32>, vector<8x8xf32> -> vector<8x8xf32>
    %67 = vector.broadcast %32 : f32 to vector<8x8xf32>
    %68 = arith.mulf %67, %66 : vector<8x8xf32>
    %69 = arith.addf %12, %68 : vector<8x8xf32>
    %70 = vector.broadcast %28 : f32 to vector<8x8xf32>
    %71 = arith.mulf %70, %21 : vector<8x8xf32>
    %72 = arith.addf %69, %71 : vector<8x8xf32>
    %c1_i32 = arith.constant 1 : i32
    %73 = arith.addi %c0_i32, %c1_i32 : i32
    %c8_i32 = arith.constant 8 : i32
    %74 = arith.muli %73, %c8_i32 : i32
    %75 = arith.index_cast %74 : i32 to index
    %c0_32 = arith.constant 0 : index
    %76 = vector.load %arg19[%75, %c0_32] : memref<64x8xf32, #tpu.memory_space<vmem>>, vector<8x8xf32>
    tpu.vector_store %arg19[%75, %c0_32], %72 {strides = array<i32>} : memref<64x8xf32, #tpu.memory_space<vmem>>, vector<8x8xf32>,
    %c1_i32_33 = arith.constant 1 : i32
    %77 = arith.index_cast %c1_i32_33 : i32 to index
    %78 = memref.load %arg0[%77] : memref<7xf32, #tpu.memory_space<smem>>
    %79 = arith.index_cast %c1_i32_33 : i32 to index
    %80 = memref.load %arg1[%79] : memref<7xf32, #tpu.memory_space<smem>>
    %81 = arith.index_cast %c1_i32_33 : i32 to index
    %82 = memref.load %arg2[%81] : memref<7xf32, #tpu.memory_space<smem>>
    %83 = vector.broadcast %80 : f32 to vector<8x64xf32>
    %84 = arith.mulf %83, %18 : vector<8x64xf32>
    %85 = vector.broadcast %78 : f32 to vector<8x64xf32>
    %86 = arith.mulf %85, %18 : vector<8x64xf32>
    %87 = math.tanh %65 : vector<8x64xf32>
    %cst_34 = arith.constant dense<0.000000e+00> : vector<8x64xf32>
    %88 = tpu.matmul %87, %14, %cst_34 {dimension_numbers = #tpu.dot_dimension_numbers<[1], [0], [0], [1], [0, 0, 1, 1], [], []>} : vector<8x64xf32>, vector<64x64xf32>, vector<8x64xf32> -> vector<8x64xf32>
    %89 = vector.broadcast %80 : f32 to vector<8x64xf32>
    %90 = arith.mulf %89, %88 : vector<8x64xf32>
    %91 = arith.addf %65, %90 : vector<8x64xf32>
    %92 = arith.addf %91, %84 : vector<8x64xf32>
    %93 = math.tanh %92 : vector<8x64xf32>
    %cst_35 = arith.constant dense<0.000000e+00> : vector<8x64xf32>
    %94 = tpu.matmul %93, %14, %cst_35 {dimension_numbers = #tpu.dot_dimension_numbers<[1], [0], [0], [1], [0, 0, 1, 1], [], []>} : vector<8x64xf32>, vector<64x64xf32>, vector<8x64xf32> -> vector<8x64xf32>
    %95 = vector.broadcast %80 : f32 to vector<8x64xf32>
    %96 = arith.mulf %95, %94 : vector<8x64xf32>
    %97 = arith.addf %65, %96 : vector<8x64xf32>
    %98 = arith.addf %97, %84 : vector<8x64xf32>
    %99 = math.tanh %98 : vector<8x64xf32>
    %cst_36 = arith.constant dense<0.000000e+00> : vector<8x64xf32>
    %100 = tpu.matmul %99, %14, %cst_36 {dimension_numbers = #tpu.dot_dimension_numbers<[1], [0], [0], [1], [0, 0, 1, 1], [], []>} : vector<8x64xf32>, vector<64x64xf32>, vector<8x64xf32> -> vector<8x64xf32>
    %101 = vector.broadcast %78 : f32 to vector<8x64xf32>
    %102 = arith.mulf %101, %100 : vector<8x64xf32>
    %103 = arith.addf %65, %102 : vector<8x64xf32>
    %104 = arith.addf %103, %86 : vector<8x64xf32>
    %105 = math.tanh %104 : vector<8x64xf32>
    %106 = arith.addf %93, %99 : vector<8x64xf32>
    %cst_37 = arith.constant 2.000000e+00 : f32
    %107 = vector.broadcast %cst_37 : f32 to vector<8x64xf32>
    %108 = arith.mulf %107, %106 : vector<8x64xf32>
    %109 = arith.addf %87, %108 : vector<8x64xf32>
    %110 = arith.addf %109, %105 : vector<8x64xf32>
    %cst_38 = arith.constant dense<0.000000e+00> : vector<8x64xf32>
    %111 = tpu.matmul %110, %14, %cst_38 {dimension_numbers = #tpu.dot_dimension_numbers<[1], [0], [0], [1], [0, 0, 1, 1], [], []>} : vector<8x64xf32>, vector<64x64xf32>, vector<8x64xf32> -> vector<8x64xf32>
    %112 = vector.broadcast %82 : f32 to vector<8x64xf32>
    %113 = arith.mulf %112, %111 : vector<8x64xf32>
    %114 = arith.addf %65, %113 : vector<8x64xf32>
    %115 = arith.addf %114, %86 : vector<8x64xf32>
    %cst_39 = arith.constant dense<0.000000e+00> : vector<8x8xf32>
    %116 = tpu.matmul %110, %15, %cst_39 {dimension_numbers = #tpu.dot_dimension_numbers<[1], [0], [0], [1], [0, 0, 1, 1], [], []>} : vector<8x64xf32>, vector<64x8xf32>, vector<8x8xf32> -> vector<8x8xf32>
    %117 = vector.broadcast %82 : f32 to vector<8x8xf32>
    %118 = arith.mulf %117, %116 : vector<8x8xf32>
    %119 = arith.addf %72, %118 : vector<8x8xf32>
    %120 = vector.broadcast %78 : f32 to vector<8x8xf32>
    %121 = arith.mulf %120, %21 : vector<8x8xf32>
    %122 = arith.addf %119, %121 : vector<8x8xf32>
    %c1_i32_40 = arith.constant 1 : i32
    %123 = arith.addi %c1_i32_33, %c1_i32_40 : i32
    %c8_i32_41 = arith.constant 8 : i32
    %124 = arith.muli %123, %c8_i32_41 : i32
    %125 = arith.index_cast %124 : i32 to index
    %c0_42 = arith.constant 0 : index
    %126 = vector.load %arg19[%125, %c0_42] : memref<64x8xf32, #tpu.memory_space<vmem>>, vector<8x8xf32>
    tpu.vector_store %arg19[%125, %c0_42], %122 {strides = array<i32>} : memref<64x8xf32, #tpu.memory_space<vmem>>, vector<8x8xf32>,
    %c2_i32 = arith.constant 2 : i32
    %127 = arith.index_cast %c2_i32 : i32 to index
    %128 = memref.load %arg0[%127] : memref<7xf32, #tpu.memory_space<smem>>
    %129 = arith.index_cast %c2_i32 : i32 to index
    %130 = memref.load %arg1[%129] : memref<7xf32, #tpu.memory_space<smem>>
    %131 = arith.index_cast %c2_i32 : i32 to index
    %132 = memref.load %arg2[%131] : memref<7xf32, #tpu.memory_space<smem>>
    %133 = vector.broadcast %130 : f32 to vector<8x64xf32>
    %134 = arith.mulf %133, %18 : vector<8x64xf32>
    %135 = vector.broadcast %128 : f32 to vector<8x64xf32>
    %136 = arith.mulf %135, %18 : vector<8x64xf32>
    %137 = math.tanh %115 : vector<8x64xf32>
    %cst_43 = arith.constant dense<0.000000e+00> : vector<8x64xf32>
    %138 = tpu.matmul %137, %14, %cst_43 {dimension_numbers = #tpu.dot_dimension_numbers<[1], [0], [0], [1], [0, 0, 1, 1], [], []>} : vector<8x64xf32>, vector<64x64xf32>, vector<8x64xf32> -> vector<8x64xf32>
    %139 = vector.broadcast %130 : f32 to vector<8x64xf32>
    %140 = arith.mulf %139, %138 : vector<8x64xf32>
    %141 = arith.addf %115, %140 : vector<8x64xf32>
    %142 = arith.addf %141, %134 : vector<8x64xf32>
    %143 = math.tanh %142 : vector<8x64xf32>
    %cst_44 = arith.constant dense<0.000000e+00> : vector<8x64xf32>
    %144 = tpu.matmul %143, %14, %cst_44 {dimension_numbers = #tpu.dot_dimension_numbers<[1], [0], [0], [1], [0, 0, 1, 1], [], []>} : vector<8x64xf32>, vector<64x64xf32>, vector<8x64xf32> -> vector<8x64xf32>
    %145 = vector.broadcast %130 : f32 to vector<8x64xf32>
    %146 = arith.mulf %145, %144 : vector<8x64xf32>
    %147 = arith.addf %115, %146 : vector<8x64xf32>
    %148 = arith.addf %147, %134 : vector<8x64xf32>
    %149 = math.tanh %148 : vector<8x64xf32>
    %cst_45 = arith.constant dense<0.000000e+00> : vector<8x64xf32>
    %150 = tpu.matmul %149, %14, %cst_45 {dimension_numbers = #tpu.dot_dimension_numbers<[1], [0], [0], [1], [0, 0, 1, 1], [], []>} : vector<8x64xf32>, vector<64x64xf32>, vector<8x64xf32> -> vector<8x64xf32>
    %151 = vector.broadcast %128 : f32 to vector<8x64xf32>
    %152 = arith.mulf %151, %150 : vector<8x64xf32>
    %153 = arith.addf %115, %152 : vector<8x64xf32>
    %154 = arith.addf %153, %136 : vector<8x64xf32>
    %155 = math.tanh %154 : vector<8x64xf32>
    %156 = arith.addf %143, %149 : vector<8x64xf32>
    %cst_46 = arith.constant 2.000000e+00 : f32
    %157 = vector.broadcast %cst_46 : f32 to vector<8x64xf32>
    %158 = arith.mulf %157, %156 : vector<8x64xf32>
    %159 = arith.addf %137, %158 : vector<8x64xf32>
    %160 = arith.addf %159, %155 : vector<8x64xf32>
    %cst_47 = arith.constant dense<0.000000e+00> : vector<8x64xf32>
    %161 = tpu.matmul %160, %14, %cst_47 {dimension_numbers = #tpu.dot_dimension_numbers<[1], [0], [0], [1], [0, 0, 1, 1], [], []>} : vector<8x64xf32>, vector<64x64xf32>, vector<8x64xf32> -> vector<8x64xf32>
    %162 = vector.broadcast %132 : f32 to vector<8x64xf32>
    %163 = arith.mulf %162, %161 : vector<8x64xf32>
    %164 = arith.addf %115, %163 : vector<8x64xf32>
    %165 = arith.addf %164, %136 : vector<8x64xf32>
    %cst_48 = arith.constant dense<0.000000e+00> : vector<8x8xf32>
    %166 = tpu.matmul %160, %15, %cst_48 {dimension_numbers = #tpu.dot_dimension_numbers<[1], [0], [0], [1], [0, 0, 1, 1], [], []>} : vector<8x64xf32>, vector<64x8xf32>, vector<8x8xf32> -> vector<8x8xf32>
    %167 = vector.broadcast %132 : f32 to vector<8x8xf32>
    %168 = arith.mulf %167, %166 : vector<8x8xf32>
    %169 = arith.addf %122, %168 : vector<8x8xf32>
    %170 = vector.broadcast %128 : f32 to vector<8x8xf32>
    %171 = arith.mulf %170, %21 : vector<8x8xf32>
    %172 = arith.addf %169, %171 : vector<8x8xf32>
    %c1_i32_49 = arith.constant 1 : i32
    %173 = arith.addi %c2_i32, %c1_i32_49 : i32
    %c8_i32_50 = arith.constant 8 : i32
    %174 = arith.muli %173, %c8_i32_50 : i32
    %175 = arith.index_cast %174 : i32 to index
    %c0_51 = arith.constant 0 : index
    %176 = vector.load %arg19[%175, %c0_51] : memref<64x8xf32, #tpu.memory_space<vmem>>, vector<8x8xf32>
    tpu.vector_store %arg19[%175, %c0_51], %172 {strides = array<i32>} : memref<64x8xf32, #tpu.memory_space<vmem>>, vector<8x8xf32>,
    %c3_i32 = arith.constant 3 : i32
    %177 = arith.index_cast %c3_i32 : i32 to index
    %178 = memref.load %arg0[%177] : memref<7xf32, #tpu.memory_space<smem>>
    %179 = arith.index_cast %c3_i32 : i32 to index
    %180 = memref.load %arg1[%179] : memref<7xf32, #tpu.memory_space<smem>>
    %181 = arith.index_cast %c3_i32 : i32 to index
    %182 = memref.load %arg2[%181] : memref<7xf32, #tpu.memory_space<smem>>
    %183 = vector.broadcast %180 : f32 to vector<8x64xf32>
    %184 = arith.mulf %183, %18 : vector<8x64xf32>
    %185 = vector.broadcast %178 : f32 to vector<8x64xf32>
    %186 = arith.mulf %185, %18 : vector<8x64xf32>
    %187 = math.tanh %165 : vector<8x64xf32>
    %cst_52 = arith.constant dense<0.000000e+00> : vector<8x64xf32>
    %188 = tpu.matmul %187, %14, %cst_52 {dimension_numbers = #tpu.dot_dimension_numbers<[1], [0], [0], [1], [0, 0, 1, 1], [], []>} : vector<8x64xf32>, vector<64x64xf32>, vector<8x64xf32> -> vector<8x64xf32>
    %189 = vector.broadcast %180 : f32 to vector<8x64xf32>
    %190 = arith.mulf %189, %188 : vector<8x64xf32>
    %191 = arith.addf %165, %190 : vector<8x64xf32>
    %192 = arith.addf %191, %184 : vector<8x64xf32>
    %193 = math.tanh %192 : vector<8x64xf32>
    %cst_53 = arith.constant dense<0.000000e+00> : vector<8x64xf32>
    %194 = tpu.matmul %193, %14, %cst_53 {dimension_numbers = #tpu.dot_dimension_numbers<[1], [0], [0], [1], [0, 0, 1, 1], [], []>} : vector<8x64xf32>, vector<64x64xf32>, vector<8x64xf32> -> vector<8x64xf32>
    %195 = vector.broadcast %180 : f32 to vector<8x64xf32>
    %196 = arith.mulf %195, %194 : vector<8x64xf32>
    %197 = arith.addf %165, %196 : vector<8x64xf32>
    %198 = arith.addf %197, %184 : vector<8x64xf32>
    %199 = math.tanh %198 : vector<8x64xf32>
    %cst_54 = arith.constant dense<0.000000e+00> : vector<8x64xf32>
    %200 = tpu.matmul %199, %14, %cst_54 {dimension_numbers = #tpu.dot_dimension_numbers<[1], [0], [0], [1], [0, 0, 1, 1], [], []>} : vector<8x64xf32>, vector<64x64xf32>, vector<8x64xf32> -> vector<8x64xf32>
    %201 = vector.broadcast %178 : f32 to vector<8x64xf32>
    %202 = arith.mulf %201, %200 : vector<8x64xf32>
    %203 = arith.addf %165, %202 : vector<8x64xf32>
    %204 = arith.addf %203, %186 : vector<8x64xf32>
    %205 = math.tanh %204 : vector<8x64xf32>
    %206 = arith.addf %193, %199 : vector<8x64xf32>
    %cst_55 = arith.constant 2.000000e+00 : f32
    %207 = vector.broadcast %cst_55 : f32 to vector<8x64xf32>
    %208 = arith.mulf %207, %206 : vector<8x64xf32>
    %209 = arith.addf %187, %208 : vector<8x64xf32>
    %210 = arith.addf %209, %205 : vector<8x64xf32>
    %cst_56 = arith.constant dense<0.000000e+00> : vector<8x64xf32>
    %211 = tpu.matmul %210, %14, %cst_56 {dimension_numbers = #tpu.dot_dimension_numbers<[1], [0], [0], [1], [0, 0, 1, 1], [], []>} : vector<8x64xf32>, vector<64x64xf32>, vector<8x64xf32> -> vector<8x64xf32>
    %212 = vector.broadcast %182 : f32 to vector<8x64xf32>
    %213 = arith.mulf %212, %211 : vector<8x64xf32>
    %214 = arith.addf %165, %213 : vector<8x64xf32>
    %215 = arith.addf %214, %186 : vector<8x64xf32>
    %cst_57 = arith.constant dense<0.000000e+00> : vector<8x8xf32>
    %216 = tpu.matmul %210, %15, %cst_57 {dimension_numbers = #tpu.dot_dimension_numbers<[1], [0], [0], [1], [0, 0, 1, 1], [], []>} : vector<8x64xf32>, vector<64x8xf32>, vector<8x8xf32> -> vector<8x8xf32>
    %217 = vector.broadcast %182 : f32 to vector<8x8xf32>
    %218 = arith.mulf %217, %216 : vector<8x8xf32>
    %219 = arith.addf %172, %218 : vector<8x8xf32>
    %220 = vector.broadcast %178 : f32 to vector<8x8xf32>
    %221 = arith.mulf %220, %21 : vector<8x8xf32>
    %222 = arith.addf %219, %221 : vector<8x8xf32>
    %c1_i32_58 = arith.constant 1 : i32
    %223 = arith.addi %c3_i32, %c1_i32_58 : i32
    %c8_i32_59 = arith.constant 8 : i32
    %224 = arith.muli %223, %c8_i32_59 : i32
    %225 = arith.index_cast %224 : i32 to index
    %c0_60 = arith.constant 0 : index
    %226 = vector.load %arg19[%225, %c0_60] : memref<64x8xf32, #tpu.memory_space<vmem>>, vector<8x8xf32>
    tpu.vector_store %arg19[%225, %c0_60], %222 {strides = array<i32>} : memref<64x8xf32, #tpu.memory_space<vmem>>, vector<8x8xf32>,
    %c4_i32 = arith.constant 4 : i32
    %227 = arith.index_cast %c4_i32 : i32 to index
    %228 = memref.load %arg0[%227] : memref<7xf32, #tpu.memory_space<smem>>
    %229 = arith.index_cast %c4_i32 : i32 to index
    %230 = memref.load %arg1[%229] : memref<7xf32, #tpu.memory_space<smem>>
    %231 = arith.index_cast %c4_i32 : i32 to index
    %232 = memref.load %arg2[%231] : memref<7xf32, #tpu.memory_space<smem>>
    %233 = vector.broadcast %230 : f32 to vector<8x64xf32>
    %234 = arith.mulf %233, %18 : vector<8x64xf32>
    %235 = vector.broadcast %228 : f32 to vector<8x64xf32>
    %236 = arith.mulf %235, %18 : vector<8x64xf32>
    %237 = math.tanh %215 : vector<8x64xf32>
    %cst_61 = arith.constant dense<0.000000e+00> : vector<8x64xf32>
    %238 = tpu.matmul %237, %14, %cst_61 {dimension_numbers = #tpu.dot_dimension_numbers<[1], [0], [0], [1], [0, 0, 1, 1], [], []>} : vector<8x64xf32>, vector<64x64xf32>, vector<8x64xf32> -> vector<8x64xf32>
    %239 = vector.broadcast %230 : f32 to vector<8x64xf32>
    %240 = arith.mulf %239, %238 : vector<8x64xf32>
    %241 = arith.addf %215, %240 : vector<8x64xf32>
    %242 = arith.addf %241, %234 : vector<8x64xf32>
    %243 = math.tanh %242 : vector<8x64xf32>
    %cst_62 = arith.constant dense<0.000000e+00> : vector<8x64xf32>
    %244 = tpu.matmul %243, %14, %cst_62 {dimension_numbers = #tpu.dot_dimension_numbers<[1], [0], [0], [1], [0, 0, 1, 1], [], []>} : vector<8x64xf32>, vector<64x64xf32>, vector<8x64xf32> -> vector<8x64xf32>
    %245 = vector.broadcast %230 : f32 to vector<8x64xf32>
    %246 = arith.mulf %245, %244 : vector<8x64xf32>
    %247 = arith.addf %215, %246 : vector<8x64xf32>
    %248 = arith.addf %247, %234 : vector<8x64xf32>
    %249 = math.tanh %248 : vector<8x64xf32>
    %cst_63 = arith.constant dense<0.000000e+00> : vector<8x64xf32>
    %250 = tpu.matmul %249, %14, %cst_63 {dimension_numbers = #tpu.dot_dimension_numbers<[1], [0], [0], [1], [0, 0, 1, 1], [], []>} : vector<8x64xf32>, vector<64x64xf32>, vector<8x64xf32> -> vector<8x64xf32>
    %251 = vector.broadcast %228 : f32 to vector<8x64xf32>
    %252 = arith.mulf %251, %250 : vector<8x64xf32>
    %253 = arith.addf %215, %252 : vector<8x64xf32>
    %254 = arith.addf %253, %236 : vector<8x64xf32>
    %255 = math.tanh %254 : vector<8x64xf32>
    %256 = arith.addf %243, %249 : vector<8x64xf32>
    %cst_64 = arith.constant 2.000000e+00 : f32
    %257 = vector.broadcast %cst_64 : f32 to vector<8x64xf32>
    %258 = arith.mulf %257, %256 : vector<8x64xf32>
    %259 = arith.addf %237, %258 : vector<8x64xf32>
    %260 = arith.addf %259, %255 : vector<8x64xf32>
    %cst_65 = arith.constant dense<0.000000e+00> : vector<8x64xf32>
    %261 = tpu.matmul %260, %14, %cst_65 {dimension_numbers = #tpu.dot_dimension_numbers<[1], [0], [0], [1], [0, 0, 1, 1], [], []>} : vector<8x64xf32>, vector<64x64xf32>, vector<8x64xf32> -> vector<8x64xf32>
    %262 = vector.broadcast %232 : f32 to vector<8x64xf32>
    %263 = arith.mulf %262, %261 : vector<8x64xf32>
    %264 = arith.addf %215, %263 : vector<8x64xf32>
    %265 = arith.addf %264, %236 : vector<8x64xf32>
    %cst_66 = arith.constant dense<0.000000e+00> : vector<8x8xf32>
    %266 = tpu.matmul %260, %15, %cst_66 {dimension_numbers = #tpu.dot_dimension_numbers<[1], [0], [0], [1], [0, 0, 1, 1], [], []>} : vector<8x64xf32>, vector<64x8xf32>, vector<8x8xf32> -> vector<8x8xf32>
    %267 = vector.broadcast %232 : f32 to vector<8x8xf32>
    %268 = arith.mulf %267, %266 : vector<8x8xf32>
    %269 = arith.addf %222, %268 : vector<8x8xf32>
    %270 = vector.broadcast %228 : f32 to vector<8x8xf32>
    %271 = arith.mulf %270, %21 : vector<8x8xf32>
    %272 = arith.addf %269, %271 : vector<8x8xf32>
    %c1_i32_67 = arith.constant 1 : i32
    %273 = arith.addi %c4_i32, %c1_i32_67 : i32
    %c8_i32_68 = arith.constant 8 : i32
    %274 = arith.muli %273, %c8_i32_68 : i32
    %275 = arith.index_cast %274 : i32 to index
    %c0_69 = arith.constant 0 : index
    %276 = vector.load %arg19[%275, %c0_69] : memref<64x8xf32, #tpu.memory_space<vmem>>, vector<8x8xf32>
    tpu.vector_store %arg19[%275, %c0_69], %272 {strides = array<i32>} : memref<64x8xf32, #tpu.memory_space<vmem>>, vector<8x8xf32>,
    %c5_i32 = arith.constant 5 : i32
    %277 = arith.index_cast %c5_i32 : i32 to index
    %278 = memref.load %arg0[%277] : memref<7xf32, #tpu.memory_space<smem>>
    %279 = arith.index_cast %c5_i32 : i32 to index
    %280 = memref.load %arg1[%279] : memref<7xf32, #tpu.memory_space<smem>>
    %281 = arith.index_cast %c5_i32 : i32 to index
    %282 = memref.load %arg2[%281] : memref<7xf32, #tpu.memory_space<smem>>
    %283 = vector.broadcast %280 : f32 to vector<8x64xf32>
    %284 = arith.mulf %283, %18 : vector<8x64xf32>
    %285 = vector.broadcast %278 : f32 to vector<8x64xf32>
    %286 = arith.mulf %285, %18 : vector<8x64xf32>
    %287 = math.tanh %265 : vector<8x64xf32>
    %cst_70 = arith.constant dense<0.000000e+00> : vector<8x64xf32>
    %288 = tpu.matmul %287, %14, %cst_70 {dimension_numbers = #tpu.dot_dimension_numbers<[1], [0], [0], [1], [0, 0, 1, 1], [], []>} : vector<8x64xf32>, vector<64x64xf32>, vector<8x64xf32> -> vector<8x64xf32>
    %289 = vector.broadcast %280 : f32 to vector<8x64xf32>
    %290 = arith.mulf %289, %288 : vector<8x64xf32>
    %291 = arith.addf %265, %290 : vector<8x64xf32>
    %292 = arith.addf %291, %284 : vector<8x64xf32>
    %293 = math.tanh %292 : vector<8x64xf32>
    %cst_71 = arith.constant dense<0.000000e+00> : vector<8x64xf32>
    %294 = tpu.matmul %293, %14, %cst_71 {dimension_numbers = #tpu.dot_dimension_numbers<[1], [0], [0], [1], [0, 0, 1, 1], [], []>} : vector<8x64xf32>, vector<64x64xf32>, vector<8x64xf32> -> vector<8x64xf32>
    %295 = vector.broadcast %280 : f32 to vector<8x64xf32>
    %296 = arith.mulf %295, %294 : vector<8x64xf32>
    %297 = arith.addf %265, %296 : vector<8x64xf32>
    %298 = arith.addf %297, %284 : vector<8x64xf32>
    %299 = math.tanh %298 : vector<8x64xf32>
    %cst_72 = arith.constant dense<0.000000e+00> : vector<8x64xf32>
    %300 = tpu.matmul %299, %14, %cst_72 {dimension_numbers = #tpu.dot_dimension_numbers<[1], [0], [0], [1], [0, 0, 1, 1], [], []>} : vector<8x64xf32>, vector<64x64xf32>, vector<8x64xf32> -> vector<8x64xf32>
    %301 = vector.broadcast %278 : f32 to vector<8x64xf32>
    %302 = arith.mulf %301, %300 : vector<8x64xf32>
    %303 = arith.addf %265, %302 : vector<8x64xf32>
    %304 = arith.addf %303, %286 : vector<8x64xf32>
    %305 = math.tanh %304 : vector<8x64xf32>
    %306 = arith.addf %293, %299 : vector<8x64xf32>
    %cst_73 = arith.constant 2.000000e+00 : f32
    %307 = vector.broadcast %cst_73 : f32 to vector<8x64xf32>
    %308 = arith.mulf %307, %306 : vector<8x64xf32>
    %309 = arith.addf %287, %308 : vector<8x64xf32>
    %310 = arith.addf %309, %305 : vector<8x64xf32>
    %cst_74 = arith.constant dense<0.000000e+00> : vector<8x64xf32>
    %311 = tpu.matmul %310, %14, %cst_74 {dimension_numbers = #tpu.dot_dimension_numbers<[1], [0], [0], [1], [0, 0, 1, 1], [], []>} : vector<8x64xf32>, vector<64x64xf32>, vector<8x64xf32> -> vector<8x64xf32>
    %312 = vector.broadcast %282 : f32 to vector<8x64xf32>
    %313 = arith.mulf %312, %311 : vector<8x64xf32>
    %314 = arith.addf %265, %313 : vector<8x64xf32>
    %315 = arith.addf %314, %286 : vector<8x64xf32>
    %cst_75 = arith.constant dense<0.000000e+00> : vector<8x8xf32>
    %316 = tpu.matmul %310, %15, %cst_75 {dimension_numbers = #tpu.dot_dimension_numbers<[1], [0], [0], [1], [0, 0, 1, 1], [], []>} : vector<8x64xf32>, vector<64x8xf32>, vector<8x8xf32> -> vector<8x8xf32>
    %317 = vector.broadcast %282 : f32 to vector<8x8xf32>
    %318 = arith.mulf %317, %316 : vector<8x8xf32>
    %319 = arith.addf %272, %318 : vector<8x8xf32>
    %320 = vector.broadcast %278 : f32 to vector<8x8xf32>
    %321 = arith.mulf %320, %21 : vector<8x8xf32>
    %322 = arith.addf %319, %321 : vector<8x8xf32>
    %c1_i32_76 = arith.constant 1 : i32
    %323 = arith.addi %c5_i32, %c1_i32_76 : i32
    %c8_i32_77 = arith.constant 8 : i32
    %324 = arith.muli %323, %c8_i32_77 : i32
    %325 = arith.index_cast %324 : i32 to index
    %c0_78 = arith.constant 0 : index
    %326 = vector.load %arg19[%325, %c0_78] : memref<64x8xf32, #tpu.memory_space<vmem>>, vector<8x8xf32>
    tpu.vector_store %arg19[%325, %c0_78], %322 {strides = array<i32>} : memref<64x8xf32, #tpu.memory_space<vmem>>, vector<8x8xf32>,
    %c6_i32 = arith.constant 6 : i32
    %327 = arith.index_cast %c6_i32 : i32 to index
    %328 = memref.load %arg0[%327] : memref<7xf32, #tpu.memory_space<smem>>
    %329 = arith.index_cast %c6_i32 : i32 to index
    %330 = memref.load %arg1[%329] : memref<7xf32, #tpu.memory_space<smem>>
    %331 = arith.index_cast %c6_i32 : i32 to index
    %332 = memref.load %arg2[%331] : memref<7xf32, #tpu.memory_space<smem>>
    %333 = vector.broadcast %330 : f32 to vector<8x64xf32>
    %334 = arith.mulf %333, %18 : vector<8x64xf32>
    %335 = vector.broadcast %328 : f32 to vector<8x64xf32>
    %336 = arith.mulf %335, %18 : vector<8x64xf32>
    %337 = math.tanh %315 : vector<8x64xf32>
    %cst_79 = arith.constant dense<0.000000e+00> : vector<8x64xf32>
    %338 = tpu.matmul %337, %14, %cst_79 {dimension_numbers = #tpu.dot_dimension_numbers<[1], [0], [0], [1], [0, 0, 1, 1], [], []>} : vector<8x64xf32>, vector<64x64xf32>, vector<8x64xf32> -> vector<8x64xf32>
    %339 = vector.broadcast %330 : f32 to vector<8x64xf32>
    %340 = arith.mulf %339, %338 : vector<8x64xf32>
    %341 = arith.addf %315, %340 : vector<8x64xf32>
    %342 = arith.addf %341, %334 : vector<8x64xf32>
    %343 = math.tanh %342 : vector<8x64xf32>
    %cst_80 = arith.constant dense<0.000000e+00> : vector<8x64xf32>
    %344 = tpu.matmul %343, %14, %cst_80 {dimension_numbers = #tpu.dot_dimension_numbers<[1], [0], [0], [1], [0, 0, 1, 1], [], []>} : vector<8x64xf32>, vector<64x64xf32>, vector<8x64xf32> -> vector<8x64xf32>
    %345 = vector.broadcast %330 : f32 to vector<8x64xf32>
    %346 = arith.mulf %345, %344 : vector<8x64xf32>
    %347 = arith.addf %315, %346 : vector<8x64xf32>
    %348 = arith.addf %347, %334 : vector<8x64xf32>
    %349 = math.tanh %348 : vector<8x64xf32>
    %cst_81 = arith.constant dense<0.000000e+00> : vector<8x64xf32>
    %350 = tpu.matmul %349, %14, %cst_81 {dimension_numbers = #tpu.dot_dimension_numbers<[1], [0], [0], [1], [0, 0, 1, 1], [], []>} : vector<8x64xf32>, vector<64x64xf32>, vector<8x64xf32> -> vector<8x64xf32>
    %351 = vector.broadcast %328 : f32 to vector<8x64xf32>
    %352 = arith.mulf %351, %350 : vector<8x64xf32>
    %353 = arith.addf %315, %352 : vector<8x64xf32>
    %354 = arith.addf %353, %336 : vector<8x64xf32>
    %355 = math.tanh %354 : vector<8x64xf32>
    %356 = arith.addf %343, %349 : vector<8x64xf32>
    %cst_82 = arith.constant 2.000000e+00 : f32
    %357 = vector.broadcast %cst_82 : f32 to vector<8x64xf32>
    %358 = arith.mulf %357, %356 : vector<8x64xf32>
    %359 = arith.addf %337, %358 : vector<8x64xf32>
    %360 = arith.addf %359, %355 : vector<8x64xf32>
    %cst_83 = arith.constant dense<0.000000e+00> : vector<8x64xf32>
    %361 = tpu.matmul %360, %14, %cst_83 {dimension_numbers = #tpu.dot_dimension_numbers<[1], [0], [0], [1], [0, 0, 1, 1], [], []>} : vector<8x64xf32>, vector<64x64xf32>, vector<8x64xf32> -> vector<8x64xf32>
    %362 = vector.broadcast %332 : f32 to vector<8x64xf32>
    %363 = arith.mulf %362, %361 : vector<8x64xf32>
    %364 = arith.addf %315, %363 : vector<8x64xf32>
    %365 = arith.addf %364, %336 : vector<8x64xf32>
    %cst_84 = arith.constant dense<0.000000e+00> : vector<8x8xf32>
    %366 = tpu.matmul %360, %15, %cst_84 {dimension_numbers = #tpu.dot_dimension_numbers<[1], [0], [0], [1], [0, 0, 1, 1], [], []>} : vector<8x64xf32>, vector<64x8xf32>, vector<8x8xf32> -> vector<8x8xf32>
    %367 = vector.broadcast %332 : f32 to vector<8x8xf32>
    %368 = arith.mulf %367, %366 : vector<8x8xf32>
    %369 = arith.addf %322, %368 : vector<8x8xf32>
    %370 = vector.broadcast %328 : f32 to vector<8x8xf32>
    %371 = arith.mulf %370, %21 : vector<8x8xf32>
    %372 = arith.addf %369, %371 : vector<8x8xf32>
    %c1_i32_85 = arith.constant 1 : i32
    %373 = arith.addi %c6_i32, %c1_i32_85 : i32
    %c8_i32_86 = arith.constant 8 : i32
    %374 = arith.muli %373, %c8_i32_86 : i32
    %375 = arith.index_cast %374 : i32 to index
    %c0_87 = arith.constant 0 : index
    %376 = vector.load %arg19[%375, %c0_87] : memref<64x8xf32, #tpu.memory_space<vmem>>, vector<8x8xf32>
    tpu.vector_store %arg19[%375, %c0_87], %372 {strides = array<i32>} : memref<64x8xf32, #tpu.memory_space<vmem>>, vector<8x8xf32>,
    %c7_i32 = arith.constant 7 : i32
    %c0_88 = arith.constant 0 : index
    %c0_89 = arith.constant 0 : index
    %377 = vector.load %arg19[%c0_88, %c0_89] : memref<64x8xf32, #tpu.memory_space<vmem>>, vector<64x8xf32>
    %c0_90 = arith.constant 0 : index
    %c0_91 = arith.constant 0 : index
    %378 = vector.load %arg14[%c0_90, %c0_91] : memref<8x64xf32, #tpu.memory_space<vmem>>, vector<8x64xf32>
    %cst_92 = arith.constant dense<0.000000e+00> : vector<64x64xf32>
    %379 = tpu.matmul %377, %378, %cst_92 {dimension_numbers = #tpu.dot_dimension_numbers<[1], [0], [0], [1], [0, 0, 1, 1], [], []>} : vector<64x8xf32>, vector<8x64xf32>, vector<64x64xf32> -> vector<64x64xf32>
    %c0_93 = arith.constant 0 : index
    %c0_94 = arith.constant 0 : index
    %380 = vector.load %arg15[%c0_93, %c0_94] : memref<1x64xf32, #tpu.memory_space<vmem>>, vector<1x64xf32>
    %381 = vector.broadcast %380 : vector<1x64xf32> to vector<64x64xf32>
    %382 = arith.addf %379, %381 : vector<64x64xf32>
    %cst_95 = arith.constant 0.000000e+00 : f32
    %383 = vector.broadcast %cst_95 : f32 to vector<64x64xf32>
    %384 = arith.maximumf %382, %383 : vector<64x64xf32>
    %c0_96 = arith.constant 0 : index
    %c0_97 = arith.constant 0 : index
    %385 = vector.load %arg16[%c0_96, %c0_97] : memref<64x2xf32, #tpu.memory_space<vmem>>, vector<64x2xf32>
    %cst_98 = arith.constant dense<0.000000e+00> : vector<64x2xf32>
    %386 = tpu.matmul %384, %385, %cst_98 {dimension_numbers = #tpu.dot_dimension_numbers<[1], [0], [0], [1], [0, 0, 1, 1], [], []>} : vector<64x64xf32>, vector<64x2xf32>, vector<64x2xf32> -> vector<64x2xf32>
    %c0_99 = arith.constant 0 : index
    %c0_100 = arith.constant 0 : index
    %387 = vector.load %arg17[%c0_99, %c0_100] : memref<1x2xf32, #tpu.memory_space<vmem>>, vector<1x2xf32>
    %388 = vector.broadcast %387 : vector<1x2xf32> to vector<64x2xf32>
    %389 = arith.addf %386, %388 : vector<64x2xf32>
    %c0_101 = arith.constant 0 : index
    %c0_102 = arith.constant 0 : index
    %390 = vector.load %arg18[%c0_101, %c0_102] : memref<64x2xf32, #tpu.memory_space<vmem>>, vector<64x2xf32>
    tpu.vector_store %arg18[%c0_101, %c0_102], %389 {strides = array<i32>} : memref<64x2xf32, #tpu.memory_space<vmem>>, vector<64x2xf32>,
    return
  }
}

</mosaic_0001>

<llo_original>
// kernel: tpu_custom_call.1
$region0: #{tpu_custom_call.1}
  #allocation0 [shape = 'u32[]', space=smem, size = 0x4, offset = 0x4, fixed_abs, tag = 'smem constant byte address 0x4 - core index']
  #allocation1 [shape = 'u32[72,128]{1,0:T(1,128)}', space=vmem, size = 0x9000, scoped, tag = 'internal scratch']
  #allocation2 [shape = 'f32[64,8]{1,0:T(8,128)}', space=vmem, size = 0x8000, scoped, tag = 'scratch operand']
  %s0 = inlined_call_operand.vmem [shape: f32[7], index: 0, kind: input, shape index: {}]
  %s1 = inlined_call_operand.vmem [shape: f32[7], index: 1, kind: input, shape index: {}]
  %s2 = inlined_call_operand.vmem [shape: f32[7], index: 2, kind: input, shape index: {}]
  %s3 = inlined_call_operand.vmem [shape: f32[8,4], index: 3, kind: input, shape index: {}]
  %s4 = inlined_call_operand.vmem [shape: f32[4,64], index: 4, kind: input, shape index: {}]
  %s5 = inlined_call_operand.vmem [shape: f32[1,64], index: 5, kind: input, shape index: {}]
  %s6 = inlined_call_operand.vmem [shape: f32[64,8], index: 6, kind: input, shape index: {}]
  %s7 = inlined_call_operand.vmem [shape: f32[1,8], index: 7, kind: input, shape index: {}]
  %s8 = inlined_call_operand.vmem [shape: f32[8,64], index: 8, kind: input, shape index: {}]
  %s9 = inlined_call_operand.vmem [shape: f32[1,64], index: 9, kind: input, shape index: {}]
  %s10 = inlined_call_operand.vmem [shape: f32[64,64], index: 10, kind: input, shape index: {}]
  %s11 = inlined_call_operand.vmem [shape: f32[1,64], index: 11, kind: input, shape index: {}]
  %s12 = inlined_call_operand.vmem [shape: f32[64,8], index: 12, kind: input, shape index: {}]
  %s13 = inlined_call_operand.vmem [shape: f32[1,8], index: 13, kind: input, shape index: {}]
  %s14 = inlined_call_operand.vmem [shape: f32[8,64], index: 14, kind: input, shape index: {}]
  %s15 = inlined_call_operand.vmem [shape: f32[1,64], index: 15, kind: input, shape index: {}]
  %s16 = inlined_call_operand.vmem [shape: f32[64,2], index: 16, kind: input, shape index: {}]
  %s17 = inlined_call_operand.vmem [shape: f32[1,2], index: 17, kind: input, shape index: {}]
  %s18 = inlined_call_operand.vmem [shape: f32[64,2], index: 18, kind: output, shape index: {}]
  %s19 = sld [smem:[#allocation0]]
  $region94: #{tpu_custom_call.1} parent=0
    _
  %s21 = ssub.s32 1, %s19
  %s22 = scalar_select 0, %s21, %s19
  $region1: #{tpu_custom_call.1} parent=0
    #allocation3 [shape = 'u8[512]{0}', space=smem, size = 0x200, scoped, tag = 'input window, operand 0, single buffered']
    #allocation4 [shape = 's32[1]{0}', space=sflag, size = 0x4, scoped, tag = 'scoped memory for tpu_custom_call.1']
    #allocation5 [shape = 'u8[512]{0}', space=smem, size = 0x200, scoped, tag = 'input window, operand 1, single buffered']
    #allocation6 [shape = 's32[1]{0}', space=sflag, size = 0x4, scoped, tag = 'scoped memory for tpu_custom_call.1']
    #allocation7 [shape = 'u8[512]{0}', space=smem, size = 0x200, scoped, tag = 'input window, operand 2, single buffered']
    %23 = vsyncpa [#allocation4], 0
    %24 = vsyncpa [#allocation6], 0
    // Predicated region
    $region2: #{tpu_custom_call.1} parent=1 // pred_check
      _
    $region3: #{tpu_custom_call.1} parent=1 // pred_check_branch
      %26 = sbr.rel (0) target = $region5
    $region4: #{tpu_custom_call.1} parent=1 // pred_region
      %28 = vsyncadd [#allocation4], 0
      %s30 = sshll.u32 %s0, 4
      %s31 = int_to_ptr.vmem [resolvable:$true] %s30
      %33 = dma.vmem_to_smem %s31, 16, [#allocation3], [#allocation4]
    $region5: #{tpu_custom_call.1} parent=1 // pred_fallthru
      _
    // Predicated region
    $region6: #{tpu_custom_call.1} parent=1 // pred_check
      _
    $region7: #{tpu_custom_call.1} parent=1 // pred_check_branch
      %35 = sbr.rel (0) target = $region9
    $region8: #{tpu_custom_call.1} parent=1 // pred_region
      %37 = vsyncadd [#allocation6], 0
      %s39 = sshll.u32 %s1, 4
      %s40 = int_to_ptr.vmem [resolvable:$true] %s39
      %42 = dma.vmem_to_smem %s40, 16, [#allocation5], [#allocation6]
    $region9: #{tpu_custom_call.1} parent=1 // pred_fallthru
      _
    // Predicated region
    $region10: #{tpu_custom_call.1} parent=1 // pred_check
      _
    $region11: #{tpu_custom_call.1} parent=1 // pred_check_branch
      %44 = sbr.rel (0) target = $region13
    $region12: #{tpu_custom_call.1} parent=1 // pred_region
      %46 = vsyncadd [#allocation6], 0
      %s48 = sshll.u32 %s2, 4
      %s49 = int_to_ptr.vmem [resolvable:$true] %s48
      %51 = dma.vmem_to_smem %s49, 16, [#allocation7], [#allocation6]
    $region13: #{tpu_custom_call.1} parent=1 // pred_fallthru
      _
    // Predicated region
    $region14: #{tpu_custom_call.1} parent=1 // pred_check
      _
    $region15: #{tpu_custom_call.1} parent=1 // pred_check_branch
      %53 = sbr.rel (0) target = $region17
    $region16: #{tpu_custom_call.1} parent=1 // pred_region
      _
    $region17: #{tpu_custom_call.1} parent=1 // pred_fallthru
      _
    // Predicated region
    $region18: #{tpu_custom_call.1} parent=1 // pred_check
      _
    $region19: #{tpu_custom_call.1} parent=1 // pred_check_branch
      %55 = sbr.rel (0) target = $region21
    $region20: #{tpu_custom_call.1} parent=1 // pred_region
      _
    $region21: #{tpu_custom_call.1} parent=1 // pred_fallthru
      _
    // Predicated region
    $region22: #{tpu_custom_call.1} parent=1 // pred_check
      _
    $region23: #{tpu_custom_call.1} parent=1 // pred_check_branch
      %57 = sbr.rel (0) target = $region25
    $region24: #{tpu_custom_call.1} parent=1 // pred_region
      _
    $region25: #{tpu_custom_call.1} parent=1 // pred_fallthru
      _
    // Predicated region
    $region26: #{tpu_custom_call.1} parent=1 // pred_check
      _
    $region27: #{tpu_custom_call.1} parent=1 // pred_check_branch
      %59 = sbr.rel (0) target = $region29
    $region28: #{tpu_custom_call.1} parent=1 // pred_region
      _
    $region29: #{tpu_custom_call.1} parent=1 // pred_fallthru
      _
    // Predicated region
    $region30: #{tpu_custom_call.1} parent=1 // pred_check
      _
    $region31: #{tpu_custom_call.1} parent=1 // pred_check_branch
      %61 = sbr.rel (0) target = $region33
    $region32: #{tpu_custom_call.1} parent=1 // pred_region
      _
    $region33: #{tpu_custom_call.1} parent=1 // pred_fallthru
      _
    // Predicated region
    $region34: #{tpu_custom_call.1} parent=1 // pred_check
      _
    $region35: #{tpu_custom_call.1} parent=1 // pred_check_branch
      %63 = sbr.rel (0) target = $region37
    $region36: #{tpu_custom_call.1} parent=1 // pred_region
      _
    $region37: #{tpu_custom_call.1} parent=1 // pred_fallthru
      _
    // Predicated region
    $region38: #{tpu_custom_call.1} parent=1 // pred_check
      _
    $region39: #{tpu_custom_call.1} parent=1 // pred_check_branch
      %65 = sbr.rel (0) target = $region41
    $region40: #{tpu_custom_call.1} parent=1 // pred_region
      _
    $region41: #{tpu_custom_call.1} parent=1 // pred_fallthru
      _
    // Predicated region
    $region42: #{tpu_custom_call.1} parent=1 // pred_check
      _
    $region43: #{tpu_custom_call.1} parent=1 // pred_check_branch
      %67 = sbr.rel (0) target = $region45
    $region44: #{tpu_custom_call.1} parent=1 // pred_region
      _
    $region45: #{tpu_custom_call.1} parent=1 // pred_fallthru
      _
    // Predicated region
    $region46: #{tpu_custom_call.1} parent=1 // pred_check
      _
    $region47: #{tpu_custom_call.1} parent=1 // pred_check_branch
      %69 = sbr.rel (0) target = $region49
    $region48: #{tpu_custom_call.1} parent=1 // pred_region
      _
    $region49: #{tpu_custom_call.1} parent=1 // pred_fallthru
      _
    // Predicated region
    $region50: #{tpu_custom_call.1} parent=1 // pred_check
      _
    $region51: #{tpu_custom_call.1} parent=1 // pred_check_branch
      %71 = sbr.rel (0) target = $region53
    $region52: #{tpu_custom_call.1} parent=1 // pred_region
      _
    $region53: #{tpu_custom_call.1} parent=1 // pred_fallthru
      _
    // Predicated region
    $region54: #{tpu_custom_call.1} parent=1 // pred_check
      _
    $region55: #{tpu_custom_call.1} parent=1 // pred_check_branch
      %73 = sbr.rel (0) target = $region57
    $region56: #{tpu_custom_call.1} parent=1 // pred_region
      _
    $region57: #{tpu_custom_call.1} parent=1 // pred_fallthru
      _
    // Predicated region
    $region58: #{tpu_custom_call.1} parent=1 // pred_check
      _
    $region59: #{tpu_custom_call.1} parent=1 // pred_check_branch
      %75 = sbr.rel (0) target = $region61
    $region60: #{tpu_custom_call.1} parent=1 // pred_region
      _
    $region61: #{tpu_custom_call.1} parent=1 // pred_fallthru
      _
    // Predicated region
    $region62: #{tpu_custom_call.1} parent=1 // pred_check
      _
    $region63: #{tpu_custom_call.1} parent=1 // pred_check_branch
      %77 = sbr.rel (0) target = $region65
    $region64: #{tpu_custom_call.1} parent=1 // pred_region
      _
    $region65: #{tpu_custom_call.1} parent=1 // pred_fallthru
      _
    // Predicated region
    $region66: #{tpu_custom_call.1} parent=1 // pred_check
      _
    $region67: #{tpu_custom_call.1} parent=1 // pred_check_branch
      %79 = sbr.rel (0) target = $region69
    $region68: #{tpu_custom_call.1} parent=1 // pred_region
      _
    $region69: #{tpu_custom_call.1} parent=1 // pred_fallthru
      _
    // Predicated region
    $region70: #{tpu_custom_call.1} parent=1 // pred_check
      _
    $region71: #{tpu_custom_call.1} parent=1 // pred_check_branch
      %81 = sbr.rel (0) target = $region73
    $region72: #{tpu_custom_call.1} parent=1 // pred_region
      _
    $region73: #{tpu_custom_call.1} parent=1 // pred_fallthru
      _
    // Predicated region
    $region74: #{tpu_custom_call.1} parent=1 // pred_check
      _
    $region75: #{tpu_custom_call.1} parent=1 // pred_check_branch
      %83 = sbr.rel (0) target = $region77
    $region76: #{tpu_custom_call.1} parent=1 // pred_region
      %85 = dma.done [#allocation4], 16
    $region77: #{tpu_custom_call.1} parent=1 // pred_fallthru
      _
    // Predicated region
    $region78: #{tpu_custom_call.1} parent=1 // pred_check
      _
    $region79: #{tpu_custom_call.1} parent=1 // pred_check_branch
      %87 = sbr.rel (0) target = $region81
    $region80: #{tpu_custom_call.1} parent=1 // pred_region
      %89 = dma.done [#allocation6], 16
    $region81: #{tpu_custom_call.1} parent=1 // pred_fallthru
      _
    // Predicated region
    $region82: #{tpu_custom_call.1} parent=1 // pred_check
      _
    $region83: #{tpu_custom_call.1} parent=1 // pred_check_branch
      %91 = sbr.rel (0) target = $region85
    $region84: #{tpu_custom_call.1} parent=1 // pred_region
      %93 = dma.done [#allocation6], 16
    $region85: #{tpu_custom_call.1} parent=1 // pred_fallthru
      _
    %94 = sfence
    %v95 = vld [vmem:[%s3] sm:$0xff]
    %v96 = vld [vmem:[%s4] sm:$0xf]
    %v97 = vld [vmem:[%s5] sm:$0x1]
    %v99 = vperm.slane %v97, 0
    %vm101 = vcmask 31744
    %v103 = vsel %vm101, %v95, 0
    %vm105 = vcmask 1043456
    %v107 = vsel %vm105, %v96, 0
    %109 = vmatpush.msra.mxu0 0.0
    %110 = vmatpush.msra.mxu0 0.0
    %111 = vmatpush.msra.mxu0 0.0
    %112 = vmatpush.msra.mxu0 0.0
    %113 = vmatpush.msra.mxu0 0.0
    %114 = vmatpush.msra.mxu0 0.0
    %115 = vmatpush.msra.mxu0 0.0
    %116 = vmatpush.msra.mxu0 0.0
    %117 = vmatpush.msra.mxu0 0.0
    %118 = vmatpush.msra.mxu0 0.0
    %119 = vmatpush.msra.mxu0 0.0
    %120 = vmatpush.msra.mxu0 0.0
    %121 = vmatpush.msra.mxu0 0.0
    %122 = vmatpush.msra.mxu0 0.0
    %123 = vmatpush.msra.mxu0 0.0
    %124 = vmatpush.msra.mxu0 %v107
    %125 = vmatmul.f32.gmra.mxu0 %v103
    %v126 = vpop.f32.mrf.mxu0
    %v127 = vadd.f32 %v99, %v126
    %128 = vdwg.mxu0
    %v129 = vmax.f32 %v127, 0.0
    %v130 = vld [vmem:[%s6] sm:$0xff]
    %v131 = vld [vmem:[%s6 + $0x8] sm:$0xff]
    %v132 = vld [vmem:[%s6 + $0x10] sm:$0xff]
    %v133 = vld [vmem:[%s6 + $0x18] sm:$0xff]
    %v134 = vld [vmem:[%s6 + $0x20] sm:$0xff]
    %v135 = vld [vmem:[%s6 + $0x28] sm:$0xff]
    %v136 = vld [vmem:[%s6 + $0x30] sm:$0xff]
    %v137 = vld [vmem:[%s6 + $0x38] sm:$0xff]
    %v138 = vld [vmem:[%s7] sm:$0x1]
    %v140 = vperm.slane %v138, 0
    %vm142 = vcmask 523264
    %v144 = vsel %vm142, %v129, 0
    %146 = vmatpush.msra.mxu0 0.0
    %147 = vmatpush.msra.mxu0 0.0
    %148 = vmatpush.msra.mxu0 0.0
    %149 = vmatpush.msra.mxu0 0.0
    %150 = vmatpush.msra.mxu0 0.0
    %151 = vmatpush.msra.mxu0 0.0
    %152 = vmatpush.msra.mxu0 0.0
    %153 = vmatpush.msra.mxu0 0.0
    %154 = vmatpush.msra.mxu0 %v137
    %155 = vmatpush.msra.mxu0 %v136
    %156 = vmatpush.msra.mxu0 %v135
    %157 = vmatpush.msra.mxu0 %v134
    %158 = vmatpush.msra.mxu0 %v133
    %159 = vmatpush.msra.mxu0 %v132
    %160 = vmatpush.msra.mxu0 %v131
    %161 = vmatpush.msra.mxu0 %v130
    %162 = vmatmul.f32.gmra.mxu0 %v144
    %v163 = vpop.f32.mrf.mxu0
    %v164 = vadd.f32 %v140, %v163
    %165 = vdwg.mxu0
    %vm166 = vcmask 64512
    %167 = vst.msk [vmem:[#allocation2] sm:$0xff] %vm166, %v164
    %v168 = vld [vmem:[%s10] sm:$0xff]
    %v169 = vld [vmem:[%s10 + $0x8] sm:$0xff]
    %v170 = vld [vmem:[%s10 + $0x10] sm:$0xff]
    %v171 = vld [vmem:[%s10 + $0x18] sm:$0xff]
    %v172 = vld [vmem:[%s10 + $0x20] sm:$0xff]
    %v173 = vld [vmem:[%s10 + $0x28] sm:$0xff]
    %v174 = vld [vmem:[%s10 + $0x30] sm:$0xff]
    %v175 = vld [vmem:[%s10 + $0x38] sm:$0xff]
    %v176 = vld [vmem:[%s12] sm:$0xff]
    %v177 = vld [vmem:[%s12 + $0x8] sm:$0xff]
    %v178 = vld [vmem:[%s12 + $0x10] sm:$0xff]
    %v179 = vld [vmem:[%s12 + $0x18] sm:$0xff]
    %v180 = vld [vmem:[%s12 + $0x20] sm:$0xff]
    %v181 = vld [vmem:[%s12 + $0x28] sm:$0xff]
    %v182 = vld [vmem:[%s12 + $0x30] sm:$0xff]
    %v183 = vld [vmem:[%s12 + $0x38] sm:$0xff]
    %v184 = vld [vmem:[%s11] sm:$0x1]
    %v186 = vperm.slane %v184, 0
    %v188 = vld [vmem:[%s13] sm:$0x1]
    %v190 = vperm.slane %v188, 0
    %v192 = vld [vmem:[%s8] sm:$0xff]
    %v193 = vld [vmem:[%s9] sm:$0x1]
    %v195 = vperm.slane %v193, 0
    %v198 = vsel %vm166, %v164, 0
    %200 = vmatpush.msra.mxu0 0.0
    %201 = vmatpush.msra.mxu0 0.0
    %202 = vmatpush.msra.mxu0 0.0
    %203 = vmatpush.msra.mxu0 0.0
    %204 = vmatpush.msra.mxu0 0.0
    %205 = vmatpush.msra.mxu0 0.0
    %206 = vmatpush.msra.mxu0 0.0
    %207 = vmatpush.msra.mxu0 0.0
    %208 = vmatpush.msra.mxu0 0.0
    %209 = vmatpush.msra.mxu0 0.0
    %210 = vmatpush.msra.mxu0 0.0
    %211 = vmatpush.msra.mxu0 0.0
    %212 = vmatpush.msra.mxu0 0.0
    %213 = vmatpush.msra.mxu0 0.0
    %214 = vmatpush.msra.mxu0 0.0
    %215 = vmatpush.msra.mxu0 %v192
    %216 = vmatmul.f32.gmra.mxu0 %v198
    %v217 = vpop.f32.mrf.mxu0
    %v218 = vadd.f32 %v195, %v217
    %219 = vdwg.mxu0
    %s220 = sld [smem:[#allocation3]]
    %s221 = sld [smem:[#allocation5]]
    %s222 = sld [smem:[#allocation7]]
    %v223 = vstv %s221
    %v224 = vmul.f32 %v223, %v186
    %v225 = vstv %s220
    %v226 = vmul.f32 %v225, %v186
    %v227 = vtanh.pop %v218
    %v229 = vsel %vm142, %v227, 0
    %231 = vmatpush.msra.mxu0 0.0
    %232 = vmatpush.msra.mxu0 0.0
    %233 = vmatpush.msra.mxu0 0.0
    %234 = vmatpush.msra.mxu0 0.0
    %235 = vmatpush.msra.mxu0 0.0
    %236 = vmatpush.msra.mxu0 0.0
    %237 = vmatpush.msra.mxu0 0.0
    %238 = vmatpush.msra.mxu0 0.0
    %239 = vmatpush.msra.mxu0 %v175
    %240 = vmatpush.msra.mxu0 %v174
    %241 = vmatpush.msra.mxu0 %v173
    %242 = vmatpush.msra.mxu0 %v172
    %243 = vmatpush.msra.mxu0 %v171
    %244 = vmatpush.msra.mxu0 %v170
    %245 = vmatpush.msra.mxu0 %v169
    %246 = vmatpush.msra.mxu0 %v168
    %247 = vmatmul.f32.gmra.mxu0 %v229
    %v248 = vpop.f32.mrf.mxu0
    %v249 = vadd.f32 0.0, %v248
    %250 = vdwg.mxu0
    %v251 = vmul.f32 %v223, %v249
    %v252 = vadd.f32 %v218, %v251
    %v253 = vadd.f32 %v252, %v224
    %v254 = vtanh.pop %v253
    %v256 = vsel %vm142, %v254, 0
    %258 = vmatpush.msra.mxu0 0.0
    %259 = vmatpush.msra.mxu0 0.0
    %260 = vmatpush.msra.mxu0 0.0
    %261 = vmatpush.msra.mxu0 0.0
    %262 = vmatpush.msra.mxu0 0.0
    %263 = vmatpush.msra.mxu0 0.0
    %264 = vmatpush.msra.mxu0 0.0
    %265 = vmatpush.msra.mxu0 0.0
    %266 = vmatpush.msra.mxu0 %v175
    %267 = vmatpush.msra.mxu0 %v174
    %268 = vmatpush.msra.mxu0 %v173
    %269 = vmatpush.msra.mxu0 %v172
    %270 = vmatpush.msra.mxu0 %v171
    %271 = vmatpush.msra.mxu0 %v170
    %272 = vmatpush.msra.mxu0 %v169
    %273 = vmatpush.msra.mxu0 %v168
    %274 = vmatmul.f32.gmra.mxu0 %v256
    %v275 = vpop.f32.mrf.mxu0
    %v276 = vadd.f32 0.0, %v275
    %277 = vdwg.mxu0
    %v278 = vmul.f32 %v223, %v276
    %v279 = vadd.f32 %v218, %v278
    %v280 = vadd.f32 %v279, %v224
    %v281 = vtanh.pop %v280
    %v283 = vsel %vm142, %v281, 0
    %285 = vmatpush.msra.mxu0 0.0
    %286 = vmatpush.msra.mxu0 0.0
    %287 = vmatpush.msra.mxu0 0.0
    %288 = vmatpush.msra.mxu0 0.0
    %289 = vmatpush.msra.mxu0 0.0
    %290 = vmatpush.msra.mxu0 0.0
    %291 = vmatpush.msra.mxu0 0.0
    %292 = vmatpush.msra.mxu0 0.0
    %293 = vmatpush.msra.mxu0 %v175
    %294 = vmatpush.msra.mxu0 %v174
    %295 = vmatpush.msra.mxu0 %v173
    %296 = vmatpush.msra.mxu0 %v172
    %297 = vmatpush.msra.mxu0 %v171
    %298 = vmatpush.msra.mxu0 %v170
    %299 = vmatpush.msra.mxu0 %v169
    %300 = vmatpush.msra.mxu0 %v168
    %301 = vmatmul.f32.gmra.mxu0 %v283
    %v302 = vpop.f32.mrf.mxu0
    %v303 = vadd.f32 0.0, %v302
    %304 = vdwg.mxu0
    %v305 = vmul.f32 %v225, %v303
    %v306 = vadd.f32 %v218, %v305
    %v307 = vadd.f32 %v306, %v226
    %v308 = vtanh.pop %v307
    %v309 = vadd.f32 %v254, %v281
    %v310 = vmul.f32 %v309, 2.0
    %v311 = vadd.f32 %v227, %v310
    %v312 = vadd.f32 %v311, %v308
    %v314 = vsel %vm142, %v312, 0
    %316 = vmatpush.msra.mxu0 0.0
    %317 = vmatpush.msra.mxu0 0.0
    %318 = vmatpush.msra.mxu0 0.0
    %319 = vmatpush.msra.mxu0 0.0
    %320 = vmatpush.msra.mxu0 0.0
    %321 = vmatpush.msra.mxu0 0.0
    %322 = vmatpush.msra.mxu0 0.0
    %323 = vmatpush.msra.mxu0 0.0
    %324 = vmatpush.msra.mxu0 %v175
    %325 = vmatpush.msra.mxu0 %v174
    %326 = vmatpush.msra.mxu0 %v173
    %327 = vmatpush.msra.mxu0 %v172
    %328 = vmatpush.msra.mxu0 %v171
    %329 = vmatpush.msra.mxu0 %v170
    %330 = vmatpush.msra.mxu0 %v169
    %331 = vmatpush.msra.mxu0 %v168
    %332 = vmatmul.f32.gmra.mxu0 %v314
    %v333 = vpop.f32.mrf.mxu0
    %v334 = vadd.f32 0.0, %v333
    %335 = vdwg.mxu0
    %v336 = vstv %s222
    %v337 = vmul.f32 %v336, %v334
    %v338 = vadd.f32 %v218, %v337
    %v339 = vadd.f32 %v338, %v226
    %340 = vmatpush.msra.mxu0 0.0
    %341 = vmatpush.msra.mxu0 0.0
    %342 = vmatpush.msra.mxu0 0.0
    %343 = vmatpush.msra.mxu0 0.0
    %344 = vmatpush.msra.mxu0 0.0
    %345 = vmatpush.msra.mxu0 0.0
    %346 = vmatpush.msra.mxu0 0.0
    %347 = vmatpush.msra.mxu0 0.0
    %348 = vmatpush.msra.mxu0 %v183
    %349 = vmatpush.msra.mxu0 %v182
    %350 = vmatpush.msra.mxu0 %v181
    %351 = vmatpush.msra.mxu0 %v180
    %352 = vmatpush.msra.mxu0 %v179
    %353 = vmatpush.msra.mxu0 %v178
    %354 = vmatpush.msra.mxu0 %v177
    %355 = vmatpush.msra.mxu0 %v176
    %356 = vmatmul.f32.gmra.mxu0 %v314
    %v357 = vpop.f32.mrf.mxu0
    %v358 = vadd.f32 0.0, %v357
    %359 = vdwg.mxu0
    %v360 = vmul.f32 %v336, %v358
    %v361 = vadd.f32 %v164, %v360
    %v362 = vmul.f32 %v225, %v190
    %v363 = vadd.f32 %v361, %v362
    %364 = vst.msk [vmem:[#allocation2 + $0x8] sm:$0xff] %vm166, %v363
    %s365 = sld [smem:[#allocation3 + $0x1]]
    %s366 = sld [smem:[#allocation5 + $0x1]]
    %s367 = sld [smem:[#allocation7 + $0x1]]
    %v368 = vstv %s366
    %v369 = vmul.f32 %v368, %v186
    %v370 = vstv %s365
    %v371 = vmul.f32 %v370, %v186
    %v372 = vtanh.pop %v339
    %v374 = vsel %vm142, %v372, 0
    %376 = vmatpush.msra.mxu0 0.0
    %377 = vmatpush.msra.mxu0 0.0
    %378 = vmatpush.msra.mxu0 0.0
    %379 = vmatpush.msra.mxu0 0.0
    %380 = vmatpush.msra.mxu0 0.0
    %381 = vmatpush.msra.mxu0 0.0
    %382 = vmatpush.msra.mxu0 0.0
    %383 = vmatpush.msra.mxu0 0.0
    %384 = vmatpush.msra.mxu0 %v175
    %385 = vmatpush.msra.mxu0 %v174
    %386 = vmatpush.msra.mxu0 %v173
    %387 = vmatpush.msra.mxu0 %v172
    %388 = vmatpush.msra.mxu0 %v171
    %389 = vmatpush.msra.mxu0 %v170
    %390 = vmatpush.msra.mxu0 %v169
    %391 = vmatpush.msra.mxu0 %v168
    %392 = vmatmul.f32.gmra.mxu0 %v374
    %v393 = vpop.f32.mrf.mxu0
    %v394 = vadd.f32 0.0, %v393
    %395 = vdwg.mxu0
    %v396 = vmul.f32 %v368, %v394
    %v397 = vadd.f32 %v339, %v396
    %v398 = vadd.f32 %v397, %v369
    %v399 = vtanh.pop %v398
    %v401 = vsel %vm142, %v399, 0
    %403 = vmatpush.msra.mxu0 0.0
    %404 = vmatpush.msra.mxu0 0.0
    %405 = vmatpush.msra.mxu0 0.0
    %406 = vmatpush.msra.mxu0 0.0
    %407 = vmatpush.msra.mxu0 0.0
    %408 = vmatpush.msra.mxu0 0.0
    %409 = vmatpush.msra.mxu0 0.0
    %410 = vmatpush.msra.mxu0 0.0
    %411 = vmatpush.msra.mxu0 %v175
    %412 = vmatpush.msra.mxu0 %v174
    %413 = vmatpush.msra.mxu0 %v173
    %414 = vmatpush.msra.mxu0 %v172
    %415 = vmatpush.msra.mxu0 %v171
    %416 = vmatpush.msra.mxu0 %v170
    %417 = vmatpush.msra.mxu0 %v169
    %418 = vmatpush.msra.mxu0 %v168
    %419 = vmatmul.f32.gmra.mxu0 %v401
    %v420 = vpop.f32.mrf.mxu0
    %v421 = vadd.f32 0.0, %v420
    %422 = vdwg.mxu0
    %v423 = vmul.f32 %v368, %v421
    %v424 = vadd.f32 %v339, %v423
    %v425 = vadd.f32 %v424, %v369
    %v426 = vtanh.pop %v425
    %v428 = vsel %vm142, %v426, 0
    %430 = vmatpush.msra.mxu0 0.0
    %431 = vmatpush.msra.mxu0 0.0
    %432 = vmatpush.msra.mxu0 0.0
    %433 = vmatpush.msra.mxu0 0.0
    %434 = vmatpush.msra.mxu0 0.0
    %435 = vmatpush.msra.mxu0 0.0
    %436 = vmatpush.msra.mxu0 0.0
    %437 = vmatpush.msra.mxu0 0.0
    %438 = vmatpush.msra.mxu0 %v175
    %439 = vmatpush.msra.mxu0 %v174
    %440 = vmatpush.msra.mxu0 %v173
    %441 = vmatpush.msra.mxu0 %v172
    %442 = vmatpush.msra.mxu0 %v171
    %443 = vmatpush.msra.mxu0 %v170
    %444 = vmatpush.msra.mxu0 %v169
    %445 = vmatpush.msra.mxu0 %v168
    %446 = vmatmul.f32.gmra.mxu0 %v428
    %v447 = vpop.f32.mrf.mxu0
    %v448 = vadd.f32 0.0, %v447
    %449 = vdwg.mxu0
    %v450 = vmul.f32 %v370, %v448
    %v451 = vadd.f32 %v339, %v450
    %v452 = vadd.f32 %v451, %v371
    %v453 = vtanh.pop %v452
    %v454 = vadd.f32 %v399, %v426
    %v455 = vmul.f32 %v454, 2.0
    %v456 = vadd.f32 %v372, %v455
    %v457 = vadd.f32 %v456, %v453
    %v459 = vsel %vm142, %v457, 0
    %461 = vmatpush.msra.mxu0 0.0
    %462 = vmatpush.msra.mxu0 0.0
    %463 = vmatpush.msra.mxu0 0.0
    %464 = vmatpush.msra.mxu0 0.0
    %465 = vmatpush.msra.mxu0 0.0
    %466 = vmatpush.msra.mxu0 0.0
    %467 = vmatpush.msra.mxu0 0.0
    %468 = vmatpush.msra.mxu0 0.0
    %469 = vmatpush.msra.mxu0 %v175
    %470 = vmatpush.msra.mxu0 %v174
    %471 = vmatpush.msra.mxu0 %v173
    %472 = vmatpush.msra.mxu0 %v172
    %473 = vmatpush.msra.mxu0 %v171
    %474 = vmatpush.msra.mxu0 %v170
    %475 = vmatpush.msra.mxu0 %v169
    %476 = vmatpush.msra.mxu0 %v168
    %477 = vmatmul.f32.gmra.mxu0 %v459
    %v478 = vpop.f32.mrf.mxu0
    %v479 = vadd.f32 0.0, %v478
    %480 = vdwg.mxu0
    %v481 = vstv %s367
    %v482 = vmul.f32 %v481, %v479
    %v483 = vadd.f32 %v339, %v482
    %v484 = vadd.f32 %v483, %v371
    %485 = vmatpush.msra.mxu0 0.0
    %486 = vmatpush.msra.mxu0 0.0
    %487 = vmatpush.msra.mxu0 0.0
    %488 = vmatpush.msra.mxu0 0.0
    %489 = vmatpush.msra.mxu0 0.0
    %490 = vmatpush.msra.mxu0 0.0
    %491 = vmatpush.msra.mxu0 0.0
    %492 = vmatpush.msra.mxu0 0.0
    %493 = vmatpush.msra.mxu0 %v183
    %494 = vmatpush.msra.mxu0 %v182
    %495 = vmatpush.msra.mxu0 %v181
    %496 = vmatpush.msra.mxu0 %v180
    %497 = vmatpush.msra.mxu0 %v179
    %498 = vmatpush.msra.mxu0 %v178
    %499 = vmatpush.msra.mxu0 %v177
    %500 = vmatpush.msra.mxu0 %v176
    %501 = vmatmul.f32.gmra.mxu0 %v459
    %v502 = vpop.f32.mrf.mxu0
    %v503 = vadd.f32 0.0, %v502
    %504 = vdwg.mxu0
    %v505 = vmul.f32 %v481, %v503
    %v506 = vadd.f32 %v363, %v505
    %v507 = vmul.f32 %v370, %v190
    %v508 = vadd.f32 %v506, %v507
    %509 = vst.msk [vmem:[#allocation2 + $0x10] sm:$0xff] %vm166, %v508
    %s510 = sld [smem:[#allocation3 + $0x2]]
    %s511 = sld [smem:[#allocation5 + $0x2]]
    %s512 = sld [smem:[#allocation7 + $0x2]]
    %v513 = vstv %s511
    %v514 = vmul.f32 %v513, %v186
    %v515 = vstv %s510
    %v516 = vmul.f32 %v515, %v186
    %v517 = vtanh.pop %v484
    %v519 = vsel %vm142, %v517, 0
    %521 = vmatpush.msra.mxu0 0.0
    %522 = vmatpush.msra.mxu0 0.0
    %523 = vmatpush.msra.mxu0 0.0
    %524 = vmatpush.msra.mxu0 0.0
    %525 = vmatpush.msra.mxu0 0.0
    %526 = vmatpush.msra.mxu0 0.0
    %527 = vmatpush.msra.mxu0 0.0
    %528 = vmatpush.msra.mxu0 0.0
    %529 = vmatpush.msra.mxu0 %v175
    %530 = vmatpush.msra.mxu0 %v174
    %531 = vmatpush.msra.mxu0 %v173
    %532 = vmatpush.msra.mxu0 %v172
    %533 = vmatpush.msra.mxu0 %v171
    %534 = vmatpush.msra.mxu0 %v170
    %535 = vmatpush.msra.mxu0 %v169
    %536 = vmatpush.msra.mxu0 %v168
    %537 = vmatmul.f32.gmra.mxu0 %v519
    %v538 = vpop.f32.mrf.mxu0
    %v539 = vadd.f32 0.0, %v538
    %540 = vdwg.mxu0
    %v541 = vmul.f32 %v513, %v539
    %v542 = vadd.f32 %v484, %v541
    %v543 = vadd.f32 %v542, %v514
    %v544 = vtanh.pop %v543
    %v546 = vsel %vm142, %v544, 0
    %548 = vmatpush.msra.mxu0 0.0
    %549 = vmatpush.msra.mxu0 0.0
    %550 = vmatpush.msra.mxu0 0.0
    %551 = vmatpush.msra.mxu0 0.0
    %552 = vmatpush.msra.mxu0 0.0
    %553 = vmatpush.msra.mxu0 0.0
    %554 = vmatpush.msra.mxu0 0.0
    %555 = vmatpush.msra.mxu0 0.0
    %556 = vmatpush.msra.mxu0 %v175
    %557 = vmatpush.msra.mxu0 %v174
    %558 = vmatpush.msra.mxu0 %v173
    %559 = vmatpush.msra.mxu0 %v172
    %560 = vmatpush.msra.mxu0 %v171
    %561 = vmatpush.msra.mxu0 %v170
    %562 = vmatpush.msra.mxu0 %v169
    %563 = vmatpush.msra.mxu0 %v168
    %564 = vmatmul.f32.gmra.mxu0 %v546
    %v565 = vpop.f32.mrf.mxu0
    %v566 = vadd.f32 0.0, %v565
    %567 = vdwg.mxu0
    %v568 = vmul.f32 %v513, %v566
    %v569 = vadd.f32 %v484, %v568
    %v570 = vadd.f32 %v569, %v514
    %v571 = vtanh.pop %v570
    %v573 = vsel %vm142, %v571, 0
    %575 = vmatpush.msra.mxu0 0.0
    %576 = vmatpush.msra.mxu0 0.0
    %577 = vmatpush.msra.mxu0 0.0
    %578 = vmatpush.msra.mxu0 0.0
    %579 = vmatpush.msra.mxu0 0.0
    %580 = vmatpush.msra.mxu0 0.0
    %581 = vmatpush.msra.mxu0 0.0
    %582 = vmatpush.msra.mxu0 0.0
    %583 = vmatpush.msra.mxu0 %v175
    %584 = vmatpush.msra.mxu0 %v174
    %585 = vmatpush.msra.mxu0 %v173
    %586 = vmatpush.msra.mxu0 %v172
    %587 = vmatpush.msra.mxu0 %v171
    %588 = vmatpush.msra.mxu0 %v170
    %589 = vmatpush.msra.mxu0 %v169
    %590 = vmatpush.msra.mxu0 %v168
    %591 = vmatmul.f32.gmra.mxu0 %v573
    %v592 = vpop.f32.mrf.mxu0
    %v593 = vadd.f32 0.0, %v592
    %594 = vdwg.mxu0
    %v595 = vmul.f32 %v515, %v593
    %v596 = vadd.f32 %v484, %v595
    %v597 = vadd.f32 %v596, %v516
    %v598 = vtanh.pop %v597
    %v599 = vadd.f32 %v544, %v571
    %v600 = vmul.f32 %v599, 2.0
    %v601 = vadd.f32 %v517, %v600
    %v602 = vadd.f32 %v601, %v598
    %v604 = vsel %vm142, %v602, 0
    %606 = vmatpush.msra.mxu0 0.0
    %607 = vmatpush.msra.mxu0 0.0
    %608 = vmatpush.msra.mxu0 0.0
    %609 = vmatpush.msra.mxu0 0.0
    %610 = vmatpush.msra.mxu0 0.0
    %611 = vmatpush.msra.mxu0 0.0
    %612 = vmatpush.msra.mxu0 0.0
    %613 = vmatpush.msra.mxu0 0.0
    %614 = vmatpush.msra.mxu0 %v175
    %615 = vmatpush.msra.mxu0 %v174
    %616 = vmatpush.msra.mxu0 %v173
    %617 = vmatpush.msra.mxu0 %v172
    %618 = vmatpush.msra.mxu0 %v171
    %619 = vmatpush.msra.mxu0 %v170
    %620 = vmatpush.msra.mxu0 %v169
    %621 = vmatpush.msra.mxu0 %v168
    %622 = vmatmul.f32.gmra.mxu0 %v604
    %v623 = vpop.f32.mrf.mxu0
    %v624 = vadd.f32 0.0, %v623
    %625 = vdwg.mxu0
    %v626 = vstv %s512
    %v627 = vmul.f32 %v626, %v624
    %v628 = vadd.f32 %v484, %v627
    %v629 = vadd.f32 %v628, %v516
    %630 = vmatpush.msra.mxu0 0.0
    %631 = vmatpush.msra.mxu0 0.0
    %632 = vmatpush.msra.mxu0 0.0
    %633 = vmatpush.msra.mxu0 0.0
    %634 = vmatpush.msra.mxu0 0.0
    %635 = vmatpush.msra.mxu0 0.0
    %636 = vmatpush.msra.mxu0 0.0
    %637 = vmatpush.msra.mxu0 0.0
    %638 = vmatpush.msra.mxu0 %v183
    %639 = vmatpush.msra.mxu0 %v182
    %640 = vmatpush.msra.mxu0 %v181
    %641 = vmatpush.msra.mxu0 %v180
    %642 = vmatpush.msra.mxu0 %v179
    %643 = vmatpush.msra.mxu0 %v178
    %644 = vmatpush.msra.mxu0 %v177
    %645 = vmatpush.msra.mxu0 %v176
    %646 = vmatmul.f32.gmra.mxu0 %v604
    %v647 = vpop.f32.mrf.mxu0
    %v648 = vadd.f32 0.0, %v647
    %649 = vdwg.mxu0
    %v650 = vmul.f32 %v626, %v648
    %v651 = vadd.f32 %v508, %v650
    %v652 = vmul.f32 %v515, %v190
    %v653 = vadd.f32 %v651, %v652
    %654 = vst.msk [vmem:[#allocation2 + $0x18] sm:$0xff] %vm166, %v653
    %s655 = sld [smem:[#allocation3 + $0x3]]
    %s656 = sld [smem:[#allocation5 + $0x3]]
    %s657 = sld [smem:[#allocation7 + $0x3]]
    %v658 = vstv %s656
    %v659 = vmul.f32 %v658, %v186
    %v660 = vstv %s655
    %v661 = vmul.f32 %v660, %v186
    %v662 = vtanh.pop %v629
    %v664 = vsel %vm142, %v662, 0
    %666 = vmatpush.msra.mxu0 0.0
    %667 = vmatpush.msra.mxu0 0.0
    %668 = vmatpush.msra.mxu0 0.0
    %669 = vmatpush.msra.mxu0 0.0
    %670 = vmatpush.msra.mxu0 0.0
    %671 = vmatpush.msra.mxu0 0.0
    %672 = vmatpush.msra.mxu0 0.0
    %673 = vmatpush.msra.mxu0 0.0
    %674 = vmatpush.msra.mxu0 %v175
    %675 = vmatpush.msra.mxu0 %v174
    %676 = vmatpush.msra.mxu0 %v173
    %677 = vmatpush.msra.mxu0 %v172
    %678 = vmatpush.msra.mxu0 %v171
    %679 = vmatpush.msra.mxu0 %v170
    %680 = vmatpush.msra.mxu0 %v169
    %681 = vmatpush.msra.mxu0 %v168
    %682 = vmatmul.f32.gmra.mxu0 %v664
    %v683 = vpop.f32.mrf.mxu0
    %v684 = vadd.f32 0.0, %v683
    %685 = vdwg.mxu0
    %v686 = vmul.f32 %v658, %v684
    %v687 = vadd.f32 %v629, %v686
    %v688 = vadd.f32 %v687, %v659
    %v689 = vtanh.pop %v688
    %v691 = vsel %vm142, %v689, 0
    %693 = vmatpush.msra.mxu0 0.0
    %694 = vmatpush.msra.mxu0 0.0
    %695 = vmatpush.msra.mxu0 0.0
    %696 = vmatpush.msra.mxu0 0.0
    %697 = vmatpush.msra.mxu0 0.0
    %698 = vmatpush.msra.mxu0 0.0
    %699 = vmatpush.msra.mxu0 0.0
    %700 = vmatpush.msra.mxu0 0.0
    %701 = vmatpush.msra.mxu0 %v175
    %702 = vmatpush.msra.mxu0 %v174
    %703 = vmatpush.msra.mxu0 %v173
    %704 = vmatpush.msra.mxu0 %v172
    %705 = vmatpush.msra.mxu0 %v171
    %706 = vmatpush.msra.mxu0 %v170
    %707 = vmatpush.msra.mxu0 %v169
    %708 = vmatpush.msra.mxu0 %v168
    %709 = vmatmul.f32.gmra.mxu0 %v691
    %v710 = vpop.f32.mrf.mxu0
    %v711 = vadd.f32 0.0, %v710
    %712 = vdwg.mxu0
    %v713 = vmul.f32 %v658, %v711
    %v714 = vadd.f32 %v629, %v713
    %v715 = vadd.f32 %v714, %v659
    %v716 = vtanh.pop %v715
    %v718 = vsel %vm142, %v716, 0
    %720 = vmatpush.msra.mxu0 0.0
    %721 = vmatpush.msra.mxu0 0.0
    %722 = vmatpush.msra.mxu0 0.0
    %723 = vmatpush.msra.mxu0 0.0
    %724 = vmatpush.msra.mxu0 0.0
    %725 = vmatpush.msra.mxu0 0.0
    %726 = vmatpush.msra.mxu0 0.0
    %727 = vmatpush.msra.mxu0 0.0
    %728 = vmatpush.msra.mxu0 %v175
    %729 = vmatpush.msra.mxu0 %v174
    %730 = vmatpush.msra.mxu0 %v173
    %731 = vmatpush.msra.mxu0 %v172
    %732 = vmatpush.msra.mxu0 %v171
    %733 = vmatpush.msra.mxu0 %v170
    %734 = vmatpush.msra.mxu0 %v169
    %735 = vmatpush.msra.mxu0 %v168
    %736 = vmatmul.f32.gmra.mxu0 %v718
    %v737 = vpop.f32.mrf.mxu0
    %v738 = vadd.f32 0.0, %v737
    %739 = vdwg.mxu0
    %v740 = vmul.f32 %v660, %v738
    %v741 = vadd.f32 %v629, %v740
    %v742 = vadd.f32 %v741, %v661
    %v743 = vtanh.pop %v742
    %v744 = vadd.f32 %v689, %v716
    %v745 = vmul.f32 %v744, 2.0
    %v746 = vadd.f32 %v662, %v745
    %v747 = vadd.f32 %v746, %v743
    %v749 = vsel %vm142, %v747, 0
    %751 = vmatpush.msra.mxu0 0.0
    %752 = vmatpush.msra.mxu0 0.0
    %753 = vmatpush.msra.mxu0 0.0
    %754 = vmatpush.msra.mxu0 0.0
    %755 = vmatpush.msra.mxu0 0.0
    %756 = vmatpush.msra.mxu0 0.0
    %757 = vmatpush.msra.mxu0 0.0
    %758 = vmatpush.msra.mxu0 0.0
    %759 = vmatpush.msra.mxu0 %v175
    %760 = vmatpush.msra.mxu0 %v174
    %761 = vmatpush.msra.mxu0 %v173
    %762 = vmatpush.msra.mxu0 %v172
    %763 = vmatpush.msra.mxu0 %v171
    %764 = vmatpush.msra.mxu0 %v170
    %765 = vmatpush.msra.mxu0 %v169
    %766 = vmatpush.msra.mxu0 %v168
    %767 = vmatmul.f32.gmra.mxu0 %v749
    %v768 = vpop.f32.mrf.mxu0
    %v769 = vadd.f32 0.0, %v768
    %770 = vdwg.mxu0
    %v771 = vstv %s657
    %v772 = vmul.f32 %v771, %v769
    %v773 = vadd.f32 %v629, %v772
    %v774 = vadd.f32 %v773, %v661
    %775 = vmatpush.msra.mxu0 0.0
    %776 = vmatpush.msra.mxu0 0.0
    %777 = vmatpush.msra.mxu0 0.0
    %778 = vmatpush.msra.mxu0 0.0
    %779 = vmatpush.msra.mxu0 0.0
    %780 = vmatpush.msra.mxu0 0.0
    %781 = vmatpush.msra.mxu0 0.0
    %782 = vmatpush.msra.mxu0 0.0
    %783 = vmatpush.msra.mxu0 %v183
    %784 = vmatpush.msra.mxu0 %v182
    %785 = vmatpush.msra.mxu0 %v181
    %786 = vmatpush.msra.mxu0 %v180
    %787 = vmatpush.msra.mxu0 %v179
    %788 = vmatpush.msra.mxu0 %v178
    %789 = vmatpush.msra.mxu0 %v177
    %790 = vmatpush.msra.mxu0 %v176
    %791 = vmatmul.f32.gmra.mxu0 %v749
    %v792 = vpop.f32.mrf.mxu0
    %v793 = vadd.f32 0.0, %v792
    %794 = vdwg.mxu0
    %v795 = vmul.f32 %v771, %v793
    %v796 = vadd.f32 %v653, %v795
    %v797 = vmul.f32 %v660, %v190
    %v798 = vadd.f32 %v796, %v797
    %799 = vst.msk [vmem:[#allocation2 + $0x20] sm:$0xff] %vm166, %v798
    %s800 = sld [smem:[#allocation3 + $0x4]]
    %s801 = sld [smem:[#allocation5 + $0x4]]
    %s802 = sld [smem:[#allocation7 + $0x4]]
    %v803 = vstv %s801
    %v804 = vmul.f32 %v803, %v186
    %v805 = vstv %s800
    %v806 = vmul.f32 %v805, %v186
    %v807 = vtanh.pop %v774
    %v809 = vsel %vm142, %v807, 0
    %811 = vmatpush.msra.mxu0 0.0
    %812 = vmatpush.msra.mxu0 0.0
    %813 = vmatpush.msra.mxu0 0.0
    %814 = vmatpush.msra.mxu0 0.0
    %815 = vmatpush.msra.mxu0 0.0
    %816 = vmatpush.msra.mxu0 0.0
    %817 = vmatpush.msra.mxu0 0.0
    %818 = vmatpush.msra.mxu0 0.0
    %819 = vmatpush.msra.mxu0 %v175
    %820 = vmatpush.msra.mxu0 %v174
    %821 = vmatpush.msra.mxu0 %v173
    %822 = vmatpush.msra.mxu0 %v172
    %823 = vmatpush.msra.mxu0 %v171
    %824 = vmatpush.msra.mxu0 %v170
    %825 = vmatpush.msra.mxu0 %v169
    %826 = vmatpush.msra.mxu0 %v168
    %827 = vmatmul.f32.gmra.mxu0 %v809
    %v828 = vpop.f32.mrf.mxu0
    %v829 = vadd.f32 0.0, %v828
    %830 = vdwg.mxu0
    %v831 = vmul.f32 %v803, %v829
    %v832 = vadd.f32 %v774, %v831
    %v833 = vadd.f32 %v832, %v804
    %v834 = vtanh.pop %v833
    %v836 = vsel %vm142, %v834, 0
    %838 = vmatpush.msra.mxu0 0.0
    %839 = vmatpush.msra.mxu0 0.0
    %840 = vmatpush.msra.mxu0 0.0
    %841 = vmatpush.msra.mxu0 0.0
    %842 = vmatpush.msra.mxu0 0.0
    %843 = vmatpush.msra.mxu0 0.0
    %844 = vmatpush.msra.mxu0 0.0
    %845 = vmatpush.msra.mxu0 0.0
    %846 = vmatpush.msra.mxu0 %v175
    %847 = vmatpush.msra.mxu0 %v174
    %848 = vmatpush.msra.mxu0 %v173
    %849 = vmatpush.msra.mxu0 %v172
    %850 = vmatpush.msra.mxu0 %v171
    %851 = vmatpush.msra.mxu0 %v170
    %852 = vmatpush.msra.mxu0 %v169
    %853 = vmatpush.msra.mxu0 %v168
    %854 = vmatmul.f32.gmra.mxu0 %v836
    %v855 = vpop.f32.mrf.mxu0
    %v856 = vadd.f32 0.0, %v855
    %857 = vdwg.mxu0
    %v858 = vmul.f32 %v803, %v856
    %v859 = vadd.f32 %v774, %v858
    %v860 = vadd.f32 %v859, %v804
    %v861 = vtanh.pop %v860
    %v863 = vsel %vm142, %v861, 0
    %865 = vmatpush.msra.mxu0 0.0
    %866 = vmatpush.msra.mxu0 0.0
    %867 = vmatpush.msra.mxu0 0.0
    %868 = vmatpush.msra.mxu0 0.0
    %869 = vmatpush.msra.mxu0 0.0
    %870 = vmatpush.msra.mxu0 0.0
    %871 = vmatpush.msra.mxu0 0.0
    %872 = vmatpush.msra.mxu0 0.0
    %873 = vmatpush.msra.mxu0 %v175
    %874 = vmatpush.msra.mxu0 %v174
    %875 = vmatpush.msra.mxu0 %v173
    %876 = vmatpush.msra.mxu0 %v172
    %877 = vmatpush.msra.mxu0 %v171
    %878 = vmatpush.msra.mxu0 %v170
    %879 = vmatpush.msra.mxu0 %v169
    %880 = vmatpush.msra.mxu0 %v168
    %881 = vmatmul.f32.gmra.mxu0 %v863
    %v882 = vpop.f32.mrf.mxu0
    %v883 = vadd.f32 0.0, %v882
    %884 = vdwg.mxu0
    %v885 = vmul.f32 %v805, %v883
    %v886 = vadd.f32 %v774, %v885
    %v887 = vadd.f32 %v886, %v806
    %v888 = vtanh.pop %v887
    %v889 = vadd.f32 %v834, %v861
    %v890 = vmul.f32 %v889, 2.0
    %v891 = vadd.f32 %v807, %v890
    %v892 = vadd.f32 %v891, %v888
    %v894 = vsel %vm142, %v892, 0
    %896 = vmatpush.msra.mxu0 0.0
    %897 = vmatpush.msra.mxu0 0.0
    %898 = vmatpush.msra.mxu0 0.0
    %899 = vmatpush.msra.mxu0 0.0
    %900 = vmatpush.msra.mxu0 0.0
    %901 = vmatpush.msra.mxu0 0.0
    %902 = vmatpush.msra.mxu0 0.0
    %903 = vmatpush.msra.mxu0 0.0
    %904 = vmatpush.msra.mxu0 %v175
    %905 = vmatpush.msra.mxu0 %v174
    %906 = vmatpush.msra.mxu0 %v173
    %907 = vmatpush.msra.mxu0 %v172
    %908 = vmatpush.msra.mxu0 %v171
    %909 = vmatpush.msra.mxu0 %v170
    %910 = vmatpush.msra.mxu0 %v169
    %911 = vmatpush.msra.mxu0 %v168
    %912 = vmatmul.f32.gmra.mxu0 %v894
    %v913 = vpop.f32.mrf.mxu0
    %v914 = vadd.f32 0.0, %v913
    %915 = vdwg.mxu0
    %v916 = vstv %s802
    %v917 = vmul.f32 %v916, %v914
    %v918 = vadd.f32 %v774, %v917
    %v919 = vadd.f32 %v918, %v806
    %920 = vmatpush.msra.mxu0 0.0
    %921 = vmatpush.msra.mxu0 0.0
    %922 = vmatpush.msra.mxu0 0.0
    %923 = vmatpush.msra.mxu0 0.0
    %924 = vmatpush.msra.mxu0 0.0
    %925 = vmatpush.msra.mxu0 0.0
    %926 = vmatpush.msra.mxu0 0.0
    %927 = vmatpush.msra.mxu0 0.0
    %928 = vmatpush.msra.mxu0 %v183
    %929 = vmatpush.msra.mxu0 %v182
    %930 = vmatpush.msra.mxu0 %v181
    %931 = vmatpush.msra.mxu0 %v180
    %932 = vmatpush.msra.mxu0 %v179
    %933 = vmatpush.msra.mxu0 %v178
    %934 = vmatpush.msra.mxu0 %v177
    %935 = vmatpush.msra.mxu0 %v176
    %936 = vmatmul.f32.gmra.mxu0 %v894
    %v937 = vpop.f32.mrf.mxu0
    %v938 = vadd.f32 0.0, %v937
    %939 = vdwg.mxu0
    %v940 = vmul.f32 %v916, %v938
    %v941 = vadd.f32 %v798, %v940
    %v942 = vmul.f32 %v805, %v190
    %v943 = vadd.f32 %v941, %v942
    %944 = vst.msk [vmem:[#allocation2 + $0x28] sm:$0xff] %vm166, %v943
    %s945 = sld [smem:[#allocation3 + $0x5]]
    %s946 = sld [smem:[#allocation5 + $0x5]]
    %s947 = sld [smem:[#allocation7 + $0x5]]
    %v948 = vstv %s946
    %v949 = vmul.f32 %v948, %v186
    %v950 = vstv %s945
    %v951 = vmul.f32 %v950, %v186
    %v952 = vtanh.pop %v919
    %v954 = vsel %vm142, %v952, 0
    %956 = vmatpush.msra.mxu0 0.0
    %957 = vmatpush.msra.mxu0 0.0
    %958 = vmatpush.msra.mxu0 0.0
    %959 = vmatpush.msra.mxu0 0.0
    %960 = vmatpush.msra.mxu0 0.0
    %961 = vmatpush.msra.mxu0 0.0
    %962 = vmatpush.msra.mxu0 0.0
    %963 = vmatpush.msra.mxu0 0.0
    %964 = vmatpush.msra.mxu0 %v175
    %965 = vmatpush.msra.mxu0 %v174
    %966 = vmatpush.msra.mxu0 %v173
    %967 = vmatpush.msra.mxu0 %v172
    %968 = vmatpush.msra.mxu0 %v171
    %969 = vmatpush.msra.mxu0 %v170
    %970 = vmatpush.msra.mxu0 %v169
    %971 = vmatpush.msra.mxu0 %v168
    %972 = vmatmul.f32.gmra.mxu0 %v954
    %v973 = vpop.f32.mrf.mxu0
    %v974 = vadd.f32 0.0, %v973
    %975 = vdwg.mxu0
    %v976 = vmul.f32 %v948, %v974
    %v977 = vadd.f32 %v919, %v976
    %v978 = vadd.f32 %v977, %v949
    %v979 = vtanh.pop %v978
    %v981 = vsel %vm142, %v979, 0
    %983 = vmatpush.msra.mxu0 0.0
    %984 = vmatpush.msra.mxu0 0.0
    %985 = vmatpush.msra.mxu0 0.0
    %986 = vmatpush.msra.mxu0 0.0
    %987 = vmatpush.msra.mxu0 0.0
    %988 = vmatpush.msra.mxu0 0.0
    %989 = vmatpush.msra.mxu0 0.0
    %990 = vmatpush.msra.mxu0 0.0
    %991 = vmatpush.msra.mxu0 %v175
    %992 = vmatpush.msra.mxu0 %v174
    %993 = vmatpush.msra.mxu0 %v173
    %994 = vmatpush.msra.mxu0 %v172
    %995 = vmatpush.msra.mxu0 %v171
    %996 = vmatpush.msra.mxu0 %v170
    %997 = vmatpush.msra.mxu0 %v169
    %998 = vmatpush.msra.mxu0 %v168
    %999 = vmatmul.f32.gmra.mxu0 %v981
    %v1000 = vpop.f32.mrf.mxu0
    %v1001 = vadd.f32 0.0, %v1000
    %1002 = vdwg.mxu0
    %v1003 = vmul.f32 %v948, %v1001
    %v1004 = vadd.f32 %v919, %v1003
    %v1005 = vadd.f32 %v1004, %v949
    %v1006 = vtanh.pop %v1005
    %v1008 = vsel %vm142, %v1006, 0
    %1010 = vmatpush.msra.mxu0 0.0
    %1011 = vmatpush.msra.mxu0 0.0
    %1012 = vmatpush.msra.mxu0 0.0
    %1013 = vmatpush.msra.mxu0 0.0
    %1014 = vmatpush.msra.mxu0 0.0
    %1015 = vmatpush.msra.mxu0 0.0
    %1016 = vmatpush.msra.mxu0 0.0
    %1017 = vmatpush.msra.mxu0 0.0
    %1018 = vmatpush.msra.mxu0 %v175
    %1019 = vmatpush.msra.mxu0 %v174
    %1020 = vmatpush.msra.mxu0 %v173
    %1021 = vmatpush.msra.mxu0 %v172
    %1022 = vmatpush.msra.mxu0 %v171
    %1023 = vmatpush.msra.mxu0 %v170
    %1024 = vmatpush.msra.mxu0 %v169
    %1025 = vmatpush.msra.mxu0 %v168
    %1026 = vmatmul.f32.gmra.mxu0 %v1008
    %v1027 = vpop.f32.mrf.mxu0
    %v1028 = vadd.f32 0.0, %v1027
    %1029 = vdwg.mxu0
    %v1030 = vmul.f32 %v950, %v1028
    %v1031 = vadd.f32 %v919, %v1030
    %v1032 = vadd.f32 %v1031, %v951
    %v1033 = vtanh.pop %v1032
    %v1034 = vadd.f32 %v979, %v1006
    %v1035 = vmul.f32 %v1034, 2.0
    %v1036 = vadd.f32 %v952, %v1035
    %v1037 = vadd.f32 %v1036, %v1033
    %v1039 = vsel %vm142, %v1037, 0
    %1041 = vmatpush.msra.mxu0 0.0
    %1042 = vmatpush.msra.mxu0 0.0
    %1043 = vmatpush.msra.mxu0 0.0
    %1044 = vmatpush.msra.mxu0 0.0
    %1045 = vmatpush.msra.mxu0 0.0
    %1046 = vmatpush.msra.mxu0 0.0
    %1047 = vmatpush.msra.mxu0 0.0
    %1048 = vmatpush.msra.mxu0 0.0
    %1049 = vmatpush.msra.mxu0 %v175
    %1050 = vmatpush.msra.mxu0 %v174
    %1051 = vmatpush.msra.mxu0 %v173
    %1052 = vmatpush.msra.mxu0 %v172
    %1053 = vmatpush.msra.mxu0 %v171
    %1054 = vmatpush.msra.mxu0 %v170
    %1055 = vmatpush.msra.mxu0 %v169
    %1056 = vmatpush.msra.mxu0 %v168
    %1057 = vmatmul.f32.gmra.mxu0 %v1039
    %v1058 = vpop.f32.mrf.mxu0
    %v1059 = vadd.f32 0.0, %v1058
    %1060 = vdwg.mxu0
    %v1061 = vstv %s947
    %v1062 = vmul.f32 %v1061, %v1059
    %v1063 = vadd.f32 %v919, %v1062
    %v1064 = vadd.f32 %v1063, %v951
    %1065 = vmatpush.msra.mxu0 0.0
    %1066 = vmatpush.msra.mxu0 0.0
    %1067 = vmatpush.msra.mxu0 0.0
    %1068 = vmatpush.msra.mxu0 0.0
    %1069 = vmatpush.msra.mxu0 0.0
    %1070 = vmatpush.msra.mxu0 0.0
    %1071 = vmatpush.msra.mxu0 0.0
    %1072 = vmatpush.msra.mxu0 0.0
    %1073 = vmatpush.msra.mxu0 %v183
    %1074 = vmatpush.msra.mxu0 %v182
    %1075 = vmatpush.msra.mxu0 %v181
    %1076 = vmatpush.msra.mxu0 %v180
    %1077 = vmatpush.msra.mxu0 %v179
    %1078 = vmatpush.msra.mxu0 %v178
    %1079 = vmatpush.msra.mxu0 %v177
    %1080 = vmatpush.msra.mxu0 %v176
    %1081 = vmatmul.f32.gmra.mxu0 %v1039
    %v1082 = vpop.f32.mrf.mxu0
    %v1083 = vadd.f32 0.0, %v1082
    %1084 = vdwg.mxu0
    %v1085 = vmul.f32 %v1061, %v1083
    %v1086 = vadd.f32 %v943, %v1085
    %v1087 = vmul.f32 %v950, %v190
    %v1088 = vadd.f32 %v1086, %v1087
    %1089 = vst.msk [vmem:[#allocation2 + $0x30] sm:$0xff] %vm166, %v1088
    %s1090 = sld [smem:[#allocation3 + $0x6]]
    %s1091 = sld [smem:[#allocation5 + $0x6]]
    %s1092 = sld [smem:[#allocation7 + $0x6]]
    %v1093 = vstv %s1091
    %v1094 = vmul.f32 %v1093, %v186
    %v1095 = vstv %s1090
    %v1096 = vmul.f32 %v1095, %v186
    %v1097 = vtanh.pop %v1064
    %v1099 = vsel %vm142, %v1097, 0
    %1101 = vmatpush.msra.mxu0 0.0
    %1102 = vmatpush.msra.mxu0 0.0
    %1103 = vmatpush.msra.mxu0 0.0
    %1104 = vmatpush.msra.mxu0 0.0
    %1105 = vmatpush.msra.mxu0 0.0
    %1106 = vmatpush.msra.mxu0 0.0
    %1107 = vmatpush.msra.mxu0 0.0
    %1108 = vmatpush.msra.mxu0 0.0
    %1109 = vmatpush.msra.mxu0 %v175
    %1110 = vmatpush.msra.mxu0 %v174
    %1111 = vmatpush.msra.mxu0 %v173
    %1112 = vmatpush.msra.mxu0 %v172
    %1113 = vmatpush.msra.mxu0 %v171
    %1114 = vmatpush.msra.mxu0 %v170
    %1115 = vmatpush.msra.mxu0 %v169
    %1116 = vmatpush.msra.mxu0 %v168
    %1117 = vmatmul.f32.gmra.mxu0 %v1099
    %v1118 = vpop.f32.mrf.mxu0
    %v1119 = vadd.f32 0.0, %v1118
    %1120 = vdwg.mxu0
    %v1121 = vmul.f32 %v1093, %v1119
    %v1122 = vadd.f32 %v1064, %v1121
    %v1123 = vadd.f32 %v1122, %v1094
    %v1124 = vtanh.pop %v1123
    %v1126 = vsel %vm142, %v1124, 0
    %1128 = vmatpush.msra.mxu0 0.0
    %1129 = vmatpush.msra.mxu0 0.0
    %1130 = vmatpush.msra.mxu0 0.0
    %1131 = vmatpush.msra.mxu0 0.0
    %1132 = vmatpush.msra.mxu0 0.0
    %1133 = vmatpush.msra.mxu0 0.0
    %1134 = vmatpush.msra.mxu0 0.0
    %1135 = vmatpush.msra.mxu0 0.0
    %1136 = vmatpush.msra.mxu0 %v175
    %1137 = vmatpush.msra.mxu0 %v174
    %1138 = vmatpush.msra.mxu0 %v173
    %1139 = vmatpush.msra.mxu0 %v172
    %1140 = vmatpush.msra.mxu0 %v171
    %1141 = vmatpush.msra.mxu0 %v170
    %1142 = vmatpush.msra.mxu0 %v169
    %1143 = vmatpush.msra.mxu0 %v168
    %1144 = vmatmul.f32.gmra.mxu0 %v1126
    %v1145 = vpop.f32.mrf.mxu0
    %v1146 = vadd.f32 0.0, %v1145
    %1147 = vdwg.mxu0
    %v1148 = vmul.f32 %v1093, %v1146
    %v1149 = vadd.f32 %v1064, %v1148
    %v1150 = vadd.f32 %v1149, %v1094
    %v1151 = vtanh.pop %v1150
    %v1153 = vsel %vm142, %v1151, 0
    %1155 = vmatpush.msra.mxu0 0.0
    %1156 = vmatpush.msra.mxu0 0.0
    %1157 = vmatpush.msra.mxu0 0.0
    %1158 = vmatpush.msra.mxu0 0.0
    %1159 = vmatpush.msra.mxu0 0.0
    %1160 = vmatpush.msra.mxu0 0.0
    %1161 = vmatpush.msra.mxu0 0.0
    %1162 = vmatpush.msra.mxu0 0.0
    %1163 = vmatpush.msra.mxu0 %v175
    %1164 = vmatpush.msra.mxu0 %v174
    %1165 = vmatpush.msra.mxu0 %v173
    %1166 = vmatpush.msra.mxu0 %v172
    %1167 = vmatpush.msra.mxu0 %v171
    %1168 = vmatpush.msra.mxu0 %v170
    %1169 = vmatpush.msra.mxu0 %v169
    %1170 = vmatpush.msra.mxu0 %v168
    %1171 = vmatmul.f32.gmra.mxu0 %v1153
    %v1172 = vpop.f32.mrf.mxu0
    %v1173 = vadd.f32 0.0, %v1172
    %1174 = vdwg.mxu0
    %v1175 = vmul.f32 %v1095, %v1173
    %v1176 = vadd.f32 %v1064, %v1175
    %v1177 = vadd.f32 %v1176, %v1096
    %v1178 = vtanh.pop %v1177
    %v1179 = vadd.f32 %v1124, %v1151
    %v1180 = vmul.f32 %v1179, 2.0
    %v1181 = vadd.f32 %v1097, %v1180
    %v1182 = vadd.f32 %v1181, %v1178
    %v1184 = vsel %vm142, %v1182, 0
    %1186 = vmatpush.msra.mxu0 0.0
    %1187 = vmatpush.msra.mxu0 0.0
    %1188 = vmatpush.msra.mxu0 0.0
    %1189 = vmatpush.msra.mxu0 0.0
    %1190 = vmatpush.msra.mxu0 0.0
    %1191 = vmatpush.msra.mxu0 0.0
    %1192 = vmatpush.msra.mxu0 0.0
    %1193 = vmatpush.msra.mxu0 0.0
    %1194 = vmatpush.msra.mxu0 %v183
    %1195 = vmatpush.msra.mxu0 %v182
    %1196 = vmatpush.msra.mxu0 %v181
    %1197 = vmatpush.msra.mxu0 %v180
    %1198 = vmatpush.msra.mxu0 %v179
    %1199 = vmatpush.msra.mxu0 %v178
    %1200 = vmatpush.msra.mxu0 %v177
    %1201 = vmatpush.msra.mxu0 %v176
    %1202 = vmatmul.f32.gmra.mxu0 %v1184
    %v1203 = vpop.f32.mrf.mxu0
    %v1204 = vadd.f32 0.0, %v1203
    %1205 = vdwg.mxu0
    %v1206 = vstv %s1092
    %v1207 = vmul.f32 %v1206, %v1204
    %v1208 = vadd.f32 %v1088, %v1207
    %v1209 = vmul.f32 %v1095, %v190
    %v1210 = vadd.f32 %v1208, %v1209
    %1211 = vst.msk [vmem:[#allocation2 + $0x38] sm:$0xff] %vm166, %v1210
    %v1212 = vld [vmem:[#allocation2] sm:$0xff]
    %v1213 = vld [vmem:[#allocation2 + $0x8] sm:$0xff]
    %v1214 = vld [vmem:[#allocation2 + $0x10] sm:$0xff]
    %v1215 = vld [vmem:[#allocation2 + $0x18] sm:$0xff]
    %v1216 = vld [vmem:[#allocation2 + $0x20] sm:$0xff]
    %v1217 = vld [vmem:[#allocation2 + $0x28] sm:$0xff]
    %v1218 = vld [vmem:[#allocation2 + $0x30] sm:$0xff]
    %v1219 = vld [vmem:[#allocation2 + $0x38] sm:$0xff]
    %v1220 = vld [vmem:[%s14] sm:$0xff]
    %v1221 = vld [vmem:[%s15] sm:$0x1]
    %v1223 = vperm.slane %v1221, 0
    %v1226 = vsel %vm166, %v1212, 0
    %v1229 = vsel %vm166, %v1213, 0
    %v1232 = vsel %vm166, %v1214, 0
    %v1235 = vsel %vm166, %v1215, 0
    %v1238 = vsel %vm166, %v1216, 0
    %v1241 = vsel %vm166, %v1217, 0
    %v1244 = vsel %vm166, %v1218, 0
    %v1247 = vsel %vm166, %v1219, 0
    %1249 = vmatpush.msra.mxu0 0.0
    %1250 = vmatpush.msra.mxu0 0.0
    %1251 = vmatpush.msra.mxu0 0.0
    %1252 = vmatpush.msra.mxu0 0.0
    %1253 = vmatpush.msra.mxu0 0.0
    %1254 = vmatpush.msra.mxu0 0.0
    %1255 = vmatpush.msra.mxu0 0.0
    %1256 = vmatpush.msra.mxu0 0.0
    %1257 = vmatpush.msra.mxu0 0.0
    %1258 = vmatpush.msra.mxu0 0.0
    %1259 = vmatpush.msra.mxu0 0.0
    %1260 = vmatpush.msra.mxu0 0.0
    %1261 = vmatpush.msra.mxu0 0.0
    %1262 = vmatpush.msra.mxu0 0.0
    %1263 = vmatpush.msra.mxu0 0.0
    %1264 = vmatpush.msra.mxu0 %v1220
    %1265 = vmatmul.f32.gmra.mxu0 %v1226
    %v1266 = vpop.f32.mrf.mxu0
    %v1267 = vadd.f32 %v1223, %v1266
    %1268 = vmatmul.f32.gmra.mxu0 %v1229
    %v1269 = vpop.f32.mrf.mxu0
    %v1270 = vadd.f32 %v1223, %v1269
    %1271 = vmatmul.f32.gmra.mxu0 %v1232
    %v1272 = vpop.f32.mrf.mxu0
    %v1273 = vadd.f32 %v1223, %v1272
    %1274 = vmatmul.f32.gmra.mxu0 %v1235
    %v1275 = vpop.f32.mrf.mxu0
    %v1276 = vadd.f32 %v1223, %v1275
    %1277 = vmatmul.f32.gmra.mxu0 %v1238
    %v1278 = vpop.f32.mrf.mxu0
    %v1279 = vadd.f32 %v1223, %v1278
    %1280 = vmatmul.f32.gmra.mxu0 %v1241
    %v1281 = vpop.f32.mrf.mxu0
    %v1282 = vadd.f32 %v1223, %v1281
    %1283 = vmatmul.f32.gmra.mxu0 %v1244
    %v1284 = vpop.f32.mrf.mxu0
    %v1285 = vadd.f32 %v1223, %v1284
    %1286 = vmatmul.f32.gmra.mxu0 %v1247
    %v1287 = vpop.f32.mrf.mxu0
    %v1288 = vadd.f32 %v1223, %v1287
    %1289 = vdwg.mxu0
    %v1290 = vmax.f32 %v1267, 0.0
    %v1291 = vmax.f32 %v1270, 0.0
    %v1292 = vmax.f32 %v1273, 0.0
    %v1293 = vmax.f32 %v1276, 0.0
    %v1294 = vmax.f32 %v1279, 0.0
    %v1295 = vmax.f32 %v1282, 0.0
    %v1296 = vmax.f32 %v1285, 0.0
    %v1297 = vmax.f32 %v1288, 0.0
    %v1298 = vld [vmem:[%s16] sm:$0xff]
    %v1299 = vld [vmem:[%s16 + $0x8] sm:$0xff]
    %v1300 = vld [vmem:[%s16 + $0x10] sm:$0xff]
    %v1301 = vld [vmem:[%s16 + $0x18] sm:$0xff]
    %v1302 = vld [vmem:[%s16 + $0x20] sm:$0xff]
    %v1303 = vld [vmem:[%s16 + $0x28] sm:$0xff]
    %v1304 = vld [vmem:[%s16 + $0x30] sm:$0xff]
    %v1305 = vld [vmem:[%s16 + $0x38] sm:$0xff]
    %v1306 = vld [vmem:[%s17] sm:$0x1]
    %v1308 = vperm.slane %v1306, 0
    %v1311 = vsel %vm142, %v1290, 0
    %v1314 = vsel %vm142, %v1291, 0
    %v1317 = vsel %vm142, %v1292, 0
    %v1320 = vsel %vm142, %v1293, 0
    %v1323 = vsel %vm142, %v1294, 0
    %v1326 = vsel %vm142, %v1295, 0
    %v1329 = vsel %vm142, %v1296, 0
    %v1332 = vsel %vm142, %v1297, 0
    %1334 = vmatpush.msra.mxu0 0.0
    %1335 = vmatpush.msra.mxu0 0.0
    %1336 = vmatpush.msra.mxu0 0.0
    %1337 = vmatpush.msra.mxu0 0.0
    %1338 = vmatpush.msra.mxu0 0.0
    %1339 = vmatpush.msra.mxu0 0.0
    %1340 = vmatpush.msra.mxu0 0.0
    %1341 = vmatpush.msra.mxu0 0.0
    %1342 = vmatpush.msra.mxu0 %v1305
    %1343 = vmatpush.msra.mxu0 %v1304
    %1344 = vmatpush.msra.mxu0 %v1303
    %1345 = vmatpush.msra.mxu0 %v1302
    %1346 = vmatpush.msra.mxu0 %v1301
    %1347 = vmatpush.msra.mxu0 %v1300
    %1348 = vmatpush.msra.mxu0 %v1299
    %1349 = vmatpush.msra.mxu0 %v1298
    %1350 = vmatmul.f32.gmra.mxu0 %v1311
    %v1351 = vpop.f32.mrf.mxu0
    %v1352 = vadd.f32 %v1308, %v1351
    %1353 = vmatmul.f32.gmra.mxu0 %v1314
    %v1354 = vpop.f32.mrf.mxu0
    %v1355 = vadd.f32 %v1308, %v1354
    %1356 = vmatmul.f32.gmra.mxu0 %v1317
    %v1357 = vpop.f32.mrf.mxu0
    %v1358 = vadd.f32 %v1308, %v1357
    %1359 = vmatmul.f32.gmra.mxu0 %v1320
    %v1360 = vpop.f32.mrf.mxu0
    %v1361 = vadd.f32 %v1308, %v1360
    %1362 = vmatmul.f32.gmra.mxu0 %v1323
    %v1363 = vpop.f32.mrf.mxu0
    %v1364 = vadd.f32 %v1308, %v1363
    %1365 = vmatmul.f32.gmra.mxu0 %v1326
    %v1366 = vpop.f32.mrf.mxu0
    %v1367 = vadd.f32 %v1308, %v1366
    %1368 = vmatmul.f32.gmra.mxu0 %v1329
    %v1369 = vpop.f32.mrf.mxu0
    %v1370 = vadd.f32 %v1308, %v1369
    %1371 = vmatmul.f32.gmra.mxu0 %v1332
    %v1372 = vpop.f32.mrf.mxu0
    %v1373 = vadd.f32 %v1308, %v1372
    %1374 = vdwg.mxu0
    %vm1375 = vcmask 15360
    %1376 = vst.msk [vmem:[%s18] sm:$0xff] %vm1375, %v1352
    %1377 = vst.msk [vmem:[%s18 + $0x8] sm:$0xff] %vm1375, %v1355
    %1378 = vst.msk [vmem:[%s18 + $0x10] sm:$0xff] %vm1375, %v1358
    %1379 = vst.msk [vmem:[%s18 + $0x18] sm:$0xff] %vm1375, %v1361
    %1380 = vst.msk [vmem:[%s18 + $0x20] sm:$0xff] %vm1375, %v1364
    %1381 = vst.msk [vmem:[%s18 + $0x28] sm:$0xff] %vm1375, %v1367
    %1382 = vst.msk [vmem:[%s18 + $0x30] sm:$0xff] %vm1375, %v1370
    %1383 = vst.msk [vmem:[%s18 + $0x38] sm:$0xff] %vm1375, %v1373
    // Predicated region
    $region86: #{tpu_custom_call.1} parent=1 // pred_check
      _
    $region87: #{tpu_custom_call.1} parent=1 // pred_check_branch
      %1385 = sbr.rel (0) target = $region89
    $region88: #{tpu_custom_call.1} parent=1 // pred_region
      _
    $region89: #{tpu_custom_call.1} parent=1 // pred_fallthru
      _
    // Predicated region
    $region90: #{tpu_custom_call.1} parent=1 // pred_check
      _
    $region91: #{tpu_custom_call.1} parent=1 // pred_check_branch
      %1387 = sbr.rel (0) target = $region93
    $region92: #{tpu_custom_call.1} parent=1 // pred_region
      _
    $region93: #{tpu_custom_call.1} parent=1 // pred_fallthru
      _
    %1388 = vsyncpa [#allocation4], 1
    %1389 = vsyncpa [#allocation6], 1

</llo_original>
